<compile_context>
chip_gen: v7x
topology: tpu7x:2x2x1
jax: 0.10.0
libtpu: 0.0.40
codegen_flags: <defaults>
</compile_context>

<pallas_src>
import numpy as np

import jax
import jax.numpy as jnp
from jax import lax
from jax.experimental import pallas as pl
from jax.experimental.pallas import tpu as pltpu


# ----------------------------------------------------------------------------
# Fused kernel: conv1 -> pool -> conv2 -> pool -> fc1 -> fc2 -> fc3
# ----------------------------------------------------------------------------
def _connet_kernel(x_ref, wb1_ref, b1_ref, pc1_ref,
                   wb2_ref, b2_ref, pc2_ref,
                   wf1_ref, bf1_ref, wf2_ref, bf2_ref, wf3_ref, bf3_ref,
                   o_ref,
                   col1_ref, p1_ref, col2_ref):
    """One batch tile of TB images.

    x_ref  : (TB*32, 128) bf16  stacked image rows, lane = w*3 + cin (96 used)
    wb1_ref: (640, 168)   bf16  conv1 banded weights (5 bands of 128 rows)
    b1_ref : (1, 168)     f32   conv1 bias tiled over the 28 output columns
    pc1_ref: (2, 168, 128)bf16  0/1 column-pool selectors (even / odd cols)
    wb2/b2/pc2 : same for conv2 (640,160) / (1,160) / (2,160,128)
    wf*/bf*: padded FC weights (640,128)/(128,128)/(128,128) + (1,128) biases
    o_ref  : (1, TB, 128) f32   logits (lanes 0..9 meaningful)
    col1_ref/p1_ref/col2_ref : f32 VMEM scratch for the pooling gathers
    """
    tb = o_ref.shape[1]
    m1 = tb * 32 - 4      # stacked conv1 rows (per-image rows 28..31 are dead)
    m2 = tb * 16 - 4      # stacked conv2 rows (per-image rows 10..13 are dead)

    # ---- stage 1: conv1 5x5 valid as a single K=640 banded matmul + bias + ReLU
    x = x_ref[...].astype(jnp.float32)                            # (tb*32, 128)
    slab1 = jnp.concatenate([x[i:i + m1, :] for i in range(5)],
                            axis=-1).astype(jnp.bfloat16)         # (m1, 640)
    y1 = jnp.dot(slab1, wb1_ref[...], preferred_element_type=jnp.float32)
    y1 = jnp.maximum(y1 + b1_ref[...], 0.0).astype(jnp.bfloat16)  # (m1, 168)

    # ---- stage 1: 2x2/2 max pool (cols: selector matmuls, rows: stride-2 max)
    col1_ref[pl.ds(0, m1), :] = jnp.maximum(
        jnp.dot(y1, pc1_ref[0], preferred_element_type=jnp.float32),
        jnp.dot(y1, pc1_ref[1], preferred_element_type=jnp.float32))
    col1_ref[pl.ds(m1, 4), :] = jnp.zeros((4, 128), jnp.float32)  # defined tail
    p1_ref[...] = jnp.maximum(col1_ref[pl.ds(0, tb * 16, stride=2), :],
                              col1_ref[pl.ds(1, tb * 16, stride=2), :])

    # ---- stage 2: conv2 5x5 valid (single K=640 banded matmul) + bias + ReLU
    p1 = p1_ref[...]                                              # (tb*16, 128)
    slab2 = jnp.concatenate([p1[i:i + m2, :] for i in range(5)],
                            axis=-1).astype(jnp.bfloat16)         # (m2, 640)
    y2 = jnp.dot(slab2, wb2_ref[...], preferred_element_type=jnp.float32)
    y2 = jnp.maximum(y2 + b2_ref[...], 0.0).astype(jnp.bfloat16)  # (m2, 160)

    # ---- stage 2: column pool, then row pool fused with the flatten gather.
    # Image b, pooled row h lives at stacked rows 16*b + 2*h (+1); concatenating
    # the 5 pooled rows along lanes yields the (TB, 640) fc1 input directly.
    col2_ref[pl.ds(0, m2), :] = jnp.maximum(
        jnp.dot(y2, pc2_ref[0], preferred_element_type=jnp.float32),
        jnp.dot(y2, pc2_ref[1], preferred_element_type=jnp.float32))
    feat = jnp.concatenate(
        [jnp.maximum(col2_ref[pl.ds(2 * h, tb, stride=16), :],
                     col2_ref[pl.ds(2 * h + 1, tb, stride=16), :])
         for h in range(5)], axis=-1).astype(jnp.bfloat16)        # (tb, 640)

    # ---- FC stack: fc1+ReLU -> fc2+ReLU -> fc3 (intermediates never leave VMEM)
    h = jnp.dot(feat, wf1_ref[...], preferred_element_type=jnp.float32)
    h = jnp.maximum(h + bf1_ref[...], 0.0).astype(jnp.bfloat16)
    h = jnp.dot(h, wf2_ref[...], preferred_element_type=jnp.float32)
    h = jnp.maximum(h + bf2_ref[...], 0.0).astype(jnp.bfloat16)
    out = jnp.dot(h, wf3_ref[...], preferred_element_type=jnp.float32) + bf3_ref[...]
    o_ref[0] = out.astype(o_ref.dtype)


# ----------------------------------------------------------------------------
# pallas_call wrapper
# ----------------------------------------------------------------------------
def _pick_tb(n):
    """Images per grid step: large enough to amortize the ~0.35us per-step cost
    and fill MXU rows (tb*32 ~ 512 on the 256-wide v6e/v7x MXUs), but chosen so
    any batch >= 2 yields >= 2 grid steps (keeps both v7x TensorCores busy)."""
    if n <= 1:
        return 1
    return int(min(16, max(1, (n + 1) // 2)))


def _connet_pallas(x2d, tb, kp):
    rows = x2d.shape[0]
    n_pad = rows // 32
    steps = n_pad // tb
    m1, m2 = tb * 32 - 4, tb * 16 - 4

    flops = steps * 2 * (m1 * 640 * 168 + 2 * m1 * 168 * 128
                         + m2 * 640 * 160 + 2 * m2 * 160 * 128
                         + tb * (640 + 128 + 128) * 128)
    bytes_accessed = int(x2d.size * 2 + n_pad * 128 * 4
                         + sum(int(np.prod(kp[k].shape)) * kp[k].dtype.itemsize
                               for k in kp))

    return pl.pallas_call(
        _connet_kernel,
        out_shape=jax.ShapeDtypeStruct((steps, tb, 128), jnp.float32),
        grid=(steps,),
        in_specs=[
            pl.BlockSpec((tb * 32, 128), lambda i: (i, 0)),
            pl.BlockSpec(kp["wb1"].shape, lambda i: (0, 0)),
            pl.BlockSpec(kp["b1"].shape, lambda i: (0, 0)),
            pl.BlockSpec(kp["pc1"].shape, lambda i: (0, 0, 0)),
            pl.BlockSpec(kp["wb2"].shape, lambda i: (0, 0)),
            pl.BlockSpec(kp["b2"].shape, lambda i: (0, 0)),
            pl.BlockSpec(kp["pc2"].shape, lambda i: (0, 0, 0)),
            pl.BlockSpec(kp["wf1"].shape, lambda i: (0, 0)),
            pl.BlockSpec(kp["bf1"].shape, lambda i: (0, 0)),
            pl.BlockSpec(kp["wf2"].shape, lambda i: (0, 0)),
            pl.BlockSpec(kp["bf2"].shape, lambda i: (0, 0)),
            pl.BlockSpec(kp["wf3"].shape, lambda i: (0, 0)),
            pl.BlockSpec(kp["bf3"].shape, lambda i: (0, 0)),
        ],
        out_specs=pl.BlockSpec((1, tb, 128), lambda i: (i, 0, 0)),
        scratch_shapes=[pltpu.VMEM((tb * 32, 128), jnp.float32),
                        pltpu.VMEM((tb * 16, 128), jnp.float32),
                        pltpu.VMEM((tb * 16, 128), jnp.float32)],
        compiler_params=pltpu.CompilerParams(dimension_semantics=("parallel",)),
        cost_estimate=pl.CostEstimate(flops=int(flops), transcendentals=0,
                                      bytes_accessed=bytes_accessed),
    )(x2d, kp["wb1"], kp["b1"], kp["pc1"], kp["wb2"], kp["b2"], kp["pc2"],
      kp["wf1"], kp["bf1"], kp["wf2"], kp["bf2"], kp["wf3"], kp["bf3"])


# ----------------------------------------------------------------------------
# One-time parameter preparation (banded conv weights, pool selectors, padding)
# ----------------------------------------------------------------------------
def _banded_conv_weight(w_oihw, win_pad, wo):
    """Banded weights M (kh, win_pad, wo*cout) for the (H, W*Cin) row layout:
    out[r, c*Cout+o] = sum_i x[r+i, :] @ M[i, :, c*Cout+o], with
    M[i, (c+j)*Cin + cin, c*Cout + o] = w[o, cin, i, j]."""
    cout, cin, kh, kw = w_oihw.shape
    w = np.asarray(w_oihw, np.float32)
    m = np.zeros((kh, win_pad, wo * cout), np.float32)
    for i in range(kh):
        for j in range(kw):
            blk = w[:, :, i, j].T                      # (cin, cout)
            for c in range(wo):
                p = c + j
                m[i, p * cin:(p + 1) * cin, c * cout:(c + 1) * cout] = blk
    return m


def _pool_col_selector(wo, cout, out_lanes=128):
    """0/1 selectors turning the column half of a 2x2 max pool into matmuls."""
    pc = np.zeros((2, wo * cout, out_lanes), np.float32)
    for c in range(wo // 2):
        for o in range(cout):
            pc[0, (2 * c) * cout + o, c * cout + o] = 1.0
            pc[1, (2 * c + 1) * cout + o, c * cout + o] = 1.0
    return pc


def init_params(key):
    """Canonical (torch-layout) parameters; also used by the pure-JAX reference."""
    ks = jax.random.split(key, 10)

    def nrm(k, shape, fan_in):
        return jax.random.normal(k, shape, jnp.float32) / np.sqrt(fan_in)

    p = {}
    p["conv1_w"] = nrm(ks[0], (6, 3, 5, 5), 75)        # OIHW
    p["conv1_b"] = nrm(ks[1], (6,), 75)
    p["conv2_w"] = nrm(ks[2], (16, 6, 5, 5), 150)
    p["conv2_b"] = nrm(ks[3], (16,), 150)
    p["fc1_w"] = nrm(ks[4], (400, 100), 400)           # (in, out); rows in torch (C,H,W) order
    p["fc1_b"] = nrm(ks[5], (100,), 400)
    p["fc2_w"] = nrm(ks[6], (100, 80), 100)
    p["fc2_b"] = nrm(ks[7], (80,), 100)
    p["fc3_w"] = nrm(ks[8], (80, 10), 80)
    p["fc3_b"] = nrm(ks[9], (10,), 80)
    return p


def prepare_kernel_params(p):
    bf = jnp.bfloat16
    kp = {}

    # stage 1: 32x32x3 (lanes padded to 128) -> conv 5x5 -> 28x28x6 -> pool -> 14x14x6
    kp["wb1"] = jnp.asarray(
        _banded_conv_weight(p["conv1_w"], 128, 28).reshape(5 * 128, 28 * 6), bf)
    kp["b1"] = jnp.asarray(np.tile(np.asarray(p["conv1_b"], np.float32), 28)[None, :])
    kp["pc1"] = jnp.asarray(_pool_col_selector(28, 6), bf)

    # stage 2: 14x14x6 (lanes padded to 128) -> conv 5x5 -> 10x10x16 -> pool -> 5x5x16
    kp["wb2"] = jnp.asarray(
        _banded_conv_weight(p["conv2_w"], 128, 10).reshape(5 * 128, 10 * 16), bf)
    kp["b2"] = jnp.asarray(np.tile(np.asarray(p["conv2_b"], np.float32), 10)[None, :])
    kp["pc2"] = jnp.asarray(_pool_col_selector(10, 16), bf)

    # FC stack: fold torch's NCHW flatten permutation into fc1 rows; pad all
    # K/N dims to multiples of 128 (zero rows/cols) so every store is lane-dense.
    wf1 = np.asarray(p["fc1_w"], np.float32)
    w1p = np.zeros((5 * 128, 128), np.float32)
    for co in range(16):
        for hh in range(5):
            for ww in range(5):
                # kernel feature index (h, w, c) with 128-lane rows <- torch index (c, h, w)
                w1p[hh * 128 + ww * 16 + co, :100] = wf1[co * 25 + hh * 5 + ww, :]
    w2p = np.zeros((128, 128), np.float32)
    w2p[:100, :80] = np.asarray(p["fc2_w"], np.float32)
    w3p = np.zeros((128, 128), np.float32)
    w3p[:80, :10] = np.asarray(p["fc3_w"], np.float32)

    def padb(b, n_used):
        out = np.zeros((1, 128), np.float32)
        out[0, :n_used] = np.asarray(b, np.float32)
        return out

    kp["wf1"] = jnp.asarray(w1p, bf)
    kp["bf1"] = jnp.asarray(padb(p["fc1_b"], 100))
    kp["wf2"] = jnp.asarray(w2p, bf)
    kp["bf2"] = jnp.asarray(padb(p["fc2_b"], 80))
    kp["wf3"] = jnp.asarray(w3p, bf)
    kp["bf3"] = jnp.asarray(padb(p["fc3_b"], 10))
    return kp


# ----------------------------------------------------------------------------
# Forward pass (single pallas_call) + pure-JAX reference
# ----------------------------------------------------------------------------
@jax.jit
def connet_forward(kp, x_nchw):
    n = x_nchw.shape[0]
    # glue: NCHW -> (N, 32, W*C) rows, zero-pad lanes 96..127, bf16 (one tiny XLA op)
    x = jnp.transpose(x_nchw, (0, 2, 3, 1)).reshape(n, 32, 32 * 3)
    x = jnp.pad(x, ((0, 0), (0, 0), (0, 128 - 96))).astype(jnp.bfloat16)
    tb = _pick_tb(n)
    n_pad = -(-n // tb) * tb
    if n_pad != n:
        x = jnp.pad(x, ((0, n_pad - n), (0, 0), (0, 0)))
    x2d = x.reshape(n_pad * 32, 128)                 # stacked rows, lane-dense
    out = _connet_pallas(x2d, tb, kp)                # (n_pad//tb, tb, 128)
    return out.reshape(n_pad, 128)[:n, :10]


def _q(t):
    """bf16 round-trip (mirrors the kernel's bf16 operand precision)."""
    return t.astype(jnp.bfloat16).astype(jnp.float32)


def reference_forward(p, x_nchw):
    x = _q(x_nchw.astype(jnp.float32))

    def conv_block(x, w, b):
        y = lax.conv_general_dilated(x, _q(w), (1, 1), "VALID",
                                     dimension_numbers=("NCHW", "OIHW", "NCHW"))
        y = _q(jnp.maximum(y + b[None, :, None, None], 0.0))
        return lax.reduce_window(y, -jnp.inf, lax.max,
                                 (1, 1, 2, 2), (1, 1, 2, 2), "VALID")

    x = conv_block(x, p["conv1_w"], p["conv1_b"])        # (N, 6, 14, 14)
    x = conv_block(x, p["conv2_w"], p["conv2_b"])        # (N, 16, 5, 5)
    x = x.reshape(x.shape[0], 16 * 5 * 5)                # torch view(-1, 400)
    h = _q(jnp.maximum(x @ _q(p["fc1_w"]) + p["fc1_b"], 0.0))
    h = _q(jnp.maximum(h @ _q(p["fc2_w"]) + p["fc2_b"], 0.0))
    return h @ _q(p["fc3_w"]) + p["fc3_b"]


if __name__ == "__main__":
    key = jax.random.PRNGKey(0)
    pkey, xkey = jax.random.split(key)
    params = init_params(pkey)
    kparams = prepare_kernel_params(params)

    # CIFAR-10 shaped input (the 16*5*5 flatten forces 32x32 spatial).
    # batch=2 exercises tb=1 / 2 grid steps; batch=6 exercises tb=3 batching.
    for batch in (2, 6):
        x = jax.random.normal(jax.random.fold_in(xkey, batch),
                              (batch, 3, 32, 32), jnp.float32)
        out = connet_forward(kparams, x)
        jax.block_until_ready(out)
        assert out.shape == (batch, 10), out.shape

        ref = reference_forward(params, x)
        err = float(jnp.max(jnp.abs(out - ref)))
        assert err < 2e-2, f"batch={batch}: mismatch vs reference, max abs err = {err}"
    print("KERNEL_OK")
</pallas_src>

<mosaic_0001>
module attributes {stable_mosaic.version = 11 : i64} {
  func.func @_connet_kernel(%arg0: i32, %arg1: memref<32x128xbf16, #tpu.memory_space<vmem>>, %arg2: memref<640x168xbf16, #tpu.memory_space<vmem>>, %arg3: memref<1x168xf32, #tpu.memory_space<vmem>>, %arg4: memref<2x168x128xbf16, #tpu.memory_space<vmem>>, %arg5: memref<640x160xbf16, #tpu.memory_space<vmem>>, %arg6: memref<1x160xf32, #tpu.memory_space<vmem>>, %arg7: memref<2x160x128xbf16, #tpu.memory_space<vmem>>, %arg8: memref<640x128xbf16, #tpu.memory_space<vmem>>, %arg9: memref<1x128xf32, #tpu.memory_space<vmem>>, %arg10: memref<128x128xbf16, #tpu.memory_space<vmem>>, %arg11: memref<1x128xf32, #tpu.memory_space<vmem>>, %arg12: memref<128x128xbf16, #tpu.memory_space<vmem>>, %arg13: memref<1x128xf32, #tpu.memory_space<vmem>>, %arg14: memref<1x1x128xf32, #tpu.memory_space<vmem>>, %arg15: memref<32x128xf32, #tpu.memory_space<vmem>>, %arg16: memref<16x128xf32, #tpu.memory_space<vmem>>, %arg17: memref<16x128xf32, #tpu.memory_space<vmem>>) attributes {dimension_semantics = [#tpu.dimension_semantics<parallel>], iteration_bounds = array<i64: 2>, scalar_prefetch = 0 : i64, scratch_operands = 3 : i64, tpu.core_type = #tpu.core_type<tc>, window_params = [{transform_indices = @transform_0, window_bounds = array<i64: 32, 128>}, {pipeline_mode = #tpu.pipeline_mode<synchronous>, transform_indices = @transform_1, window_bounds = array<i64: 640, 168>}, {pipeline_mode = #tpu.pipeline_mode<synchronous>, transform_indices = @transform_2, window_bounds = array<i64: 1, 168>}, {pipeline_mode = #tpu.pipeline_mode<synchronous>, transform_indices = @transform_3, window_bounds = array<i64: 2, 168, 128>}, {pipeline_mode = #tpu.pipeline_mode<synchronous>, transform_indices = @transform_4, window_bounds = array<i64: 640, 160>}, {pipeline_mode = #tpu.pipeline_mode<synchronous>, transform_indices = @transform_5, window_bounds = array<i64: 1, 160>}, {pipeline_mode = #tpu.pipeline_mode<synchronous>, transform_indices = @transform_6, window_bounds = array<i64: 2, 160, 128>}, {pipeline_mode = #tpu.pipeline_mode<synchronous>, transform_indices = @transform_7, window_bounds = array<i64: 640, 128>}, {pipeline_mode = #tpu.pipeline_mode<synchronous>, transform_indices = @transform_8, window_bounds = array<i64: 1, 128>}, {pipeline_mode = #tpu.pipeline_mode<synchronous>, transform_indices = @transform_9, window_bounds = array<i64: 128, 128>}, {pipeline_mode = #tpu.pipeline_mode<synchronous>, transform_indices = @transform_10, window_bounds = array<i64: 1, 128>}, {pipeline_mode = #tpu.pipeline_mode<synchronous>, transform_indices = @transform_11, window_bounds = array<i64: 128, 128>}, {pipeline_mode = #tpu.pipeline_mode<synchronous>, transform_indices = @transform_12, window_bounds = array<i64: 1, 128>}, {transform_indices = @transform_13, window_bounds = array<i64: 1, 1, 128>}]} {
    %c0 = arith.constant 0 : index
    %c0_0 = arith.constant 0 : index
    %0 = vector.load %arg1[%c0, %c0_0] : memref<32x128xbf16, #tpu.memory_space<vmem>>, vector<32x128xbf16>
    %1 = arith.extf %0 : vector<32x128xbf16> to vector<32x128xf32>
    %2 = vector.extract_strided_slice %1 {offsets = [0, 0], sizes = [28, 128], strides = [1, 1]} : vector<32x128xf32> to vector<28x128xf32>
    %3 = vector.extract_strided_slice %1 {offsets = [1, 0], sizes = [28, 128], strides = [1, 1]} : vector<32x128xf32> to vector<28x128xf32>
    %4 = vector.extract_strided_slice %1 {offsets = [2, 0], sizes = [28, 128], strides = [1, 1]} : vector<32x128xf32> to vector<28x128xf32>
    %5 = vector.extract_strided_slice %1 {offsets = [3, 0], sizes = [28, 128], strides = [1, 1]} : vector<32x128xf32> to vector<28x128xf32>
    %6 = vector.extract_strided_slice %1 {offsets = [4, 0], sizes = [28, 128], strides = [1, 1]} : vector<32x128xf32> to vector<28x128xf32>
    %7 = tpu.concatenate %2, %3, %4, %5, %6 in 1 : vector<28x128xf32>, vector<28x128xf32>, vector<28x128xf32>, vector<28x128xf32>, vector<28x128xf32> -> vector<28x640xf32>
    %8 = arith.truncf %7 : vector<28x640xf32> to vector<28x640xbf16>
    %c0_1 = arith.constant 0 : index
    %c0_2 = arith.constant 0 : index
    %9 = vector.load %arg2[%c0_1, %c0_2] : memref<640x168xbf16, #tpu.memory_space<vmem>>, vector<640x168xbf16>
    %cst = arith.constant dense<0.000000e+00> : vector<28x168xf32>
    %10 = tpu.matmul %8, %9, %cst {dimension_numbers = #tpu.dot_dimension_numbers<[1], [0], [0], [1], [0, 0, 1, 1], [], []>} : vector<28x640xbf16>, vector<640x168xbf16>, vector<28x168xf32> -> vector<28x168xf32>
    %c0_3 = arith.constant 0 : index
    %c0_4 = arith.constant 0 : index
    %11 = vector.load %arg3[%c0_3, %c0_4] : memref<1x168xf32, #tpu.memory_space<vmem>>, vector<1x168xf32>
    %12 = vector.broadcast %11 : vector<1x168xf32> to vector<28x168xf32>
    %13 = arith.addf %10, %12 : vector<28x168xf32>
    %cst_5 = arith.constant 0.000000e+00 : f32
    %14 = vector.broadcast %cst_5 : f32 to vector<28x168xf32>
    %15 = arith.maximumf %13, %14 : vector<28x168xf32>
    %16 = arith.truncf %15 : vector<28x168xf32> to vector<28x168xbf16>
    %c0_6 = arith.constant 0 : index
    %c0_7 = arith.constant 0 : index
    %c0_8 = arith.constant 0 : index
    %17 = vector.load %arg4[%c0_6, %c0_7, %c0_8] : memref<2x168x128xbf16, #tpu.memory_space<vmem>>, vector<1x168x128xbf16>
    %18 = vector.shape_cast %17 : vector<1x168x128xbf16> to vector<168x128xbf16>
    %cst_9 = arith.constant dense<0.000000e+00> : vector<28x128xf32>
    %19 = tpu.matmul %16, %18, %cst_9 {dimension_numbers = #tpu.dot_dimension_numbers<[1], [0], [0], [1], [0, 0, 1, 1], [], []>} : vector<28x168xbf16>, vector<168x128xbf16>, vector<28x128xf32> -> vector<28x128xf32>
    %c1 = arith.constant 1 : index
    %c0_10 = arith.constant 0 : index
    %c0_11 = arith.constant 0 : index
    %20 = vector.load %arg4[%c1, %c0_10, %c0_11] : memref<2x168x128xbf16, #tpu.memory_space<vmem>>, vector<1x168x128xbf16>
    %21 = vector.shape_cast %20 : vector<1x168x128xbf16> to vector<168x128xbf16>
    %cst_12 = arith.constant dense<0.000000e+00> : vector<28x128xf32>
    %22 = tpu.matmul %16, %21, %cst_12 {dimension_numbers = #tpu.dot_dimension_numbers<[1], [0], [0], [1], [0, 0, 1, 1], [], []>} : vector<28x168xbf16>, vector<168x128xbf16>, vector<28x128xf32> -> vector<28x128xf32>
    %23 = arith.maximumf %19, %22 : vector<28x128xf32>
    %c0_13 = arith.constant 0 : index
    %c0_14 = arith.constant 0 : index
    %24 = vector.load %arg15[%c0_13, %c0_14] : memref<32x128xf32, #tpu.memory_space<vmem>>, vector<28x128xf32>
    tpu.vector_store %arg15[%c0_13, %c0_14], %23 {strides = array<i32>} : memref<32x128xf32, #tpu.memory_space<vmem>>, vector<28x128xf32>,
    %cst_15 = arith.constant 0.000000e+00 : f32
    %25 = vector.broadcast %cst_15 : f32 to vector<4x128xf32>
    %c28 = arith.constant 28 : index
    %c0_16 = arith.constant 0 : index
    %26 = vector.load %arg15[%c28, %c0_16] : memref<32x128xf32, #tpu.memory_space<vmem>>, vector<4x128xf32>
    tpu.vector_store %arg15[%c28, %c0_16], %25 {strides = array<i32>} : memref<32x128xf32, #tpu.memory_space<vmem>>, vector<4x128xf32>,
    %c0_17 = arith.constant 0 : index
    %c0_18 = arith.constant 0 : index
    %27 = tpu.strided_load %arg15[%c0_17, %c0_18] {strides = array<i32: 2, 1>} : memref<32x128xf32, #tpu.memory_space<vmem>>, vector<16x128xf32>
    %c1_19 = arith.constant 1 : index
    %c0_20 = arith.constant 0 : index
    %28 = tpu.strided_load %arg15[%c1_19, %c0_20] {strides = array<i32: 2, 1>} : memref<32x128xf32, #tpu.memory_space<vmem>>, vector<16x128xf32>
    %29 = arith.maximumf %27, %28 : vector<16x128xf32>
    %c0_21 = arith.constant 0 : index
    %c0_22 = arith.constant 0 : index
    %30 = vector.load %arg16[%c0_21, %c0_22] : memref<16x128xf32, #tpu.memory_space<vmem>>, vector<16x128xf32>
    tpu.vector_store %arg16[%c0_21, %c0_22], %29 {strides = array<i32>} : memref<16x128xf32, #tpu.memory_space<vmem>>, vector<16x128xf32>,
    %c0_23 = arith.constant 0 : index
    %c0_24 = arith.constant 0 : index
    %31 = vector.load %arg16[%c0_23, %c0_24] : memref<16x128xf32, #tpu.memory_space<vmem>>, vector<16x128xf32>
    %32 = vector.extract_strided_slice %31 {offsets = [0, 0], sizes = [12, 128], strides = [1, 1]} : vector<16x128xf32> to vector<12x128xf32>
    %33 = vector.extract_strided_slice %31 {offsets = [1, 0], sizes = [12, 128], strides = [1, 1]} : vector<16x128xf32> to vector<12x128xf32>
    %34 = vector.extract_strided_slice %31 {offsets = [2, 0], sizes = [12, 128], strides = [1, 1]} : vector<16x128xf32> to vector<12x128xf32>
    %35 = vector.extract_strided_slice %31 {offsets = [3, 0], sizes = [12, 128], strides = [1, 1]} : vector<16x128xf32> to vector<12x128xf32>
    %36 = vector.extract_strided_slice %31 {offsets = [4, 0], sizes = [12, 128], strides = [1, 1]} : vector<16x128xf32> to vector<12x128xf32>
    %37 = tpu.concatenate %32, %33, %34, %35, %36 in 1 : vector<12x128xf32>, vector<12x128xf32>, vector<12x128xf32>, vector<12x128xf32>, vector<12x128xf32> -> vector<12x640xf32>
    %38 = arith.truncf %37 : vector<12x640xf32> to vector<12x640xbf16>
    %c0_25 = arith.constant 0 : index
    %c0_26 = arith.constant 0 : index
    %39 = vector.load %arg5[%c0_25, %c0_26] : memref<640x160xbf16, #tpu.memory_space<vmem>>, vector<640x160xbf16>
    %cst_27 = arith.constant dense<0.000000e+00> : vector<12x160xf32>
    %40 = tpu.matmul %38, %39, %cst_27 {dimension_numbers = #tpu.dot_dimension_numbers<[1], [0], [0], [1], [0, 0, 1, 1], [], []>} : vector<12x640xbf16>, vector<640x160xbf16>, vector<12x160xf32> -> vector<12x160xf32>
    %c0_28 = arith.constant 0 : index
    %c0_29 = arith.constant 0 : index
    %41 = vector.load %arg6[%c0_28, %c0_29] : memref<1x160xf32, #tpu.memory_space<vmem>>, vector<1x160xf32>
    %42 = vector.broadcast %41 : vector<1x160xf32> to vector<12x160xf32>
    %43 = arith.addf %40, %42 : vector<12x160xf32>
    %cst_30 = arith.constant 0.000000e+00 : f32
    %44 = vector.broadcast %cst_30 : f32 to vector<12x160xf32>
    %45 = arith.maximumf %43, %44 : vector<12x160xf32>
    %46 = arith.truncf %45 : vector<12x160xf32> to vector<12x160xbf16>
    %c0_31 = arith.constant 0 : index
    %c0_32 = arith.constant 0 : index
    %c0_33 = arith.constant 0 : index
    %47 = vector.load %arg7[%c0_31, %c0_32, %c0_33] : memref<2x160x128xbf16, #tpu.memory_space<vmem>>, vector<1x160x128xbf16>
    %48 = vector.shape_cast %47 : vector<1x160x128xbf16> to vector<160x128xbf16>
    %cst_34 = arith.constant dense<0.000000e+00> : vector<12x128xf32>
    %49 = tpu.matmul %46, %48, %cst_34 {dimension_numbers = #tpu.dot_dimension_numbers<[1], [0], [0], [1], [0, 0, 1, 1], [], []>} : vector<12x160xbf16>, vector<160x128xbf16>, vector<12x128xf32> -> vector<12x128xf32>
    %c1_35 = arith.constant 1 : index
    %c0_36 = arith.constant 0 : index
    %c0_37 = arith.constant 0 : index
    %50 = vector.load %arg7[%c1_35, %c0_36, %c0_37] : memref<2x160x128xbf16, #tpu.memory_space<vmem>>, vector<1x160x128xbf16>
    %51 = vector.shape_cast %50 : vector<1x160x128xbf16> to vector<160x128xbf16>
    %cst_38 = arith.constant dense<0.000000e+00> : vector<12x128xf32>
    %52 = tpu.matmul %46, %51, %cst_38 {dimension_numbers = #tpu.dot_dimension_numbers<[1], [0], [0], [1], [0, 0, 1, 1], [], []>} : vector<12x160xbf16>, vector<160x128xbf16>, vector<12x128xf32> -> vector<12x128xf32>
    %53 = arith.maximumf %49, %52 : vector<12x128xf32>
    %c0_39 = arith.constant 0 : index
    %c0_40 = arith.constant 0 : index
    %54 = vector.load %arg17[%c0_39, %c0_40] : memref<16x128xf32, #tpu.memory_space<vmem>>, vector<12x128xf32>
    tpu.vector_store %arg17[%c0_39, %c0_40], %53 {strides = array<i32>} : memref<16x128xf32, #tpu.memory_space<vmem>>, vector<12x128xf32>,
    %c0_41 = arith.constant 0 : index
    %c0_42 = arith.constant 0 : index
    %55 = tpu.strided_load %arg17[%c0_41, %c0_42] {strides = array<i32: 16, 1>} : memref<16x128xf32, #tpu.memory_space<vmem>>, vector<1x128xf32>
    %c1_43 = arith.constant 1 : index
    %c0_44 = arith.constant 0 : index
    %56 = tpu.strided_load %arg17[%c1_43, %c0_44] {strides = array<i32: 16, 1>} : memref<16x128xf32, #tpu.memory_space<vmem>>, vector<1x128xf32>
    %57 = arith.maximumf %55, %56 : vector<1x128xf32>
    %c2 = arith.constant 2 : index
    %c0_45 = arith.constant 0 : index
    %58 = tpu.strided_load %arg17[%c2, %c0_45] {strides = array<i32: 16, 1>} : memref<16x128xf32, #tpu.memory_space<vmem>>, vector<1x128xf32>
    %c3 = arith.constant 3 : index
    %c0_46 = arith.constant 0 : index
    %59 = tpu.strided_load %arg17[%c3, %c0_46] {strides = array<i32: 16, 1>} : memref<16x128xf32, #tpu.memory_space<vmem>>, vector<1x128xf32>
    %60 = arith.maximumf %58, %59 : vector<1x128xf32>
    %c4 = arith.constant 4 : index
    %c0_47 = arith.constant 0 : index
    %61 = tpu.strided_load %arg17[%c4, %c0_47] {strides = array<i32: 16, 1>} : memref<16x128xf32, #tpu.memory_space<vmem>>, vector<1x128xf32>
    %c5 = arith.constant 5 : index
    %c0_48 = arith.constant 0 : index
    %62 = tpu.strided_load %arg17[%c5, %c0_48] {strides = array<i32: 16, 1>} : memref<16x128xf32, #tpu.memory_space<vmem>>, vector<1x128xf32>
    %63 = arith.maximumf %61, %62 : vector<1x128xf32>
    %c6 = arith.constant 6 : index
    %c0_49 = arith.constant 0 : index
    %64 = tpu.strided_load %arg17[%c6, %c0_49] {strides = array<i32: 16, 1>} : memref<16x128xf32, #tpu.memory_space<vmem>>, vector<1x128xf32>
    %c7 = arith.constant 7 : index
    %c0_50 = arith.constant 0 : index
    %65 = tpu.strided_load %arg17[%c7, %c0_50] {strides = array<i32: 16, 1>} : memref<16x128xf32, #tpu.memory_space<vmem>>, vector<1x128xf32>
    %66 = arith.maximumf %64, %65 : vector<1x128xf32>
    %c8 = arith.constant 8 : index
    %c0_51 = arith.constant 0 : index
    %67 = tpu.strided_load %arg17[%c8, %c0_51] {strides = array<i32: 16, 1>} : memref<16x128xf32, #tpu.memory_space<vmem>>, vector<1x128xf32>
    %c9 = arith.constant 9 : index
    %c0_52 = arith.constant 0 : index
    %68 = tpu.strided_load %arg17[%c9, %c0_52] {strides = array<i32: 16, 1>} : memref<16x128xf32, #tpu.memory_space<vmem>>, vector<1x128xf32>
    %69 = arith.maximumf %67, %68 : vector<1x128xf32>
    %70 = tpu.concatenate %57, %60, %63, %66, %69 in 1 : vector<1x128xf32>, vector<1x128xf32>, vector<1x128xf32>, vector<1x128xf32>, vector<1x128xf32> -> vector<1x640xf32>
    %71 = arith.truncf %70 : vector<1x640xf32> to vector<1x640xbf16>
    %c0_53 = arith.constant 0 : index
    %c0_54 = arith.constant 0 : index
    %72 = vector.load %arg8[%c0_53, %c0_54] : memref<640x128xbf16, #tpu.memory_space<vmem>>, vector<640x128xbf16>
    %cst_55 = arith.constant dense<0.000000e+00> : vector<1x128xf32>
    %73 = tpu.matmul %71, %72, %cst_55 {dimension_numbers = #tpu.dot_dimension_numbers<[1], [0], [0], [1], [0, 0, 1, 1], [], []>} : vector<1x640xbf16>, vector<640x128xbf16>, vector<1x128xf32> -> vector<1x128xf32>
    %c0_56 = arith.constant 0 : index
    %c0_57 = arith.constant 0 : index
    %74 = vector.load %arg9[%c0_56, %c0_57] : memref<1x128xf32, #tpu.memory_space<vmem>>, vector<1x128xf32>
    %75 = arith.addf %73, %74 : vector<1x128xf32>
    %cst_58 = arith.constant 0.000000e+00 : f32
    %76 = vector.broadcast %cst_58 : f32 to vector<1x128xf32>
    %77 = arith.maximumf %75, %76 : vector<1x128xf32>
    %78 = arith.truncf %77 : vector<1x128xf32> to vector<1x128xbf16>
    %c0_59 = arith.constant 0 : index
    %c0_60 = arith.constant 0 : index
    %79 = vector.load %arg10[%c0_59, %c0_60] : memref<128x128xbf16, #tpu.memory_space<vmem>>, vector<128x128xbf16>
    %cst_61 = arith.constant dense<0.000000e+00> : vector<1x128xf32>
    %80 = tpu.matmul %78, %79, %cst_61 {dimension_numbers = #tpu.dot_dimension_numbers<[1], [0], [0], [1], [0, 0, 1, 1], [], []>} : vector<1x128xbf16>, vector<128x128xbf16>, vector<1x128xf32> -> vector<1x128xf32>
    %c0_62 = arith.constant 0 : index
    %c0_63 = arith.constant 0 : index
    %81 = vector.load %arg11[%c0_62, %c0_63] : memref<1x128xf32, #tpu.memory_space<vmem>>, vector<1x128xf32>
    %82 = arith.addf %80, %81 : vector<1x128xf32>
    %cst_64 = arith.constant 0.000000e+00 : f32
    %83 = vector.broadcast %cst_64 : f32 to vector<1x128xf32>
    %84 = arith.maximumf %82, %83 : vector<1x128xf32>
    %85 = arith.truncf %84 : vector<1x128xf32> to vector<1x128xbf16>
    %c0_65 = arith.constant 0 : index
    %c0_66 = arith.constant 0 : index
    %86 = vector.load %arg12[%c0_65, %c0_66] : memref<128x128xbf16, #tpu.memory_space<vmem>>, vector<128x128xbf16>
    %cst_67 = arith.constant dense<0.000000e+00> : vector<1x128xf32>
    %87 = tpu.matmul %85, %86, %cst_67 {dimension_numbers = #tpu.dot_dimension_numbers<[1], [0], [0], [1], [0, 0, 1, 1], [], []>} : vector<1x128xbf16>, vector<128x128xbf16>, vector<1x128xf32> -> vector<1x128xf32>
    %c0_68 = arith.constant 0 : index
    %c0_69 = arith.constant 0 : index
    %88 = vector.load %arg13[%c0_68, %c0_69] : memref<1x128xf32, #tpu.memory_space<vmem>>, vector<1x128xf32>
    %89 = arith.addf %87, %88 : vector<1x128xf32>
    %c0_70 = arith.constant 0 : index
    %c0_71 = arith.constant 0 : index
    %c0_72 = arith.constant 0 : index
    %90 = vector.load %arg14[%c0_70, %c0_71, %c0_72] : memref<1x1x128xf32, #tpu.memory_space<vmem>>, vector<1x1x128xf32>
    %91 = vector.shape_cast %90 : vector<1x1x128xf32> to vector<1x128xf32>
    %92 = vector.shape_cast %89 : vector<1x128xf32> to vector<1x1x128xf32>
    tpu.vector_store %arg14[%c0_70, %c0_71, %c0_72], %92 {strides = array<i32>} : memref<1x1x128xf32, #tpu.memory_space<vmem>>, vector<1x1x128xf32>,
    return
  }
  func.func @transform_0(%arg0: i32) -> (i32, i32) {
    %c0_i32 = arith.constant 0 : i32
    %c0_i32_0 = arith.constant 0 : i32
    return %arg0, %c0_i32 : i32, i32
  }
  func.func @transform_1(%arg0: i32) -> (i32, i32) {
    %c0_i32 = arith.constant 0 : i32
    %c0_i32_0 = arith.constant 0 : i32
    %c0_i32_1 = arith.constant 0 : i32
    return %c0_i32, %c0_i32_0 : i32, i32
  }
  func.func @transform_2(%arg0: i32) -> (i32, i32) {
    %c0_i32 = arith.constant 0 : i32
    %c0_i32_0 = arith.constant 0 : i32
    %c0_i32_1 = arith.constant 0 : i32
    return %c0_i32, %c0_i32_0 : i32, i32
  }
  func.func @transform_3(%arg0: i32) -> (i32, i32, i32) {
    %c0_i32 = arith.constant 0 : i32
    %c0_i32_0 = arith.constant 0 : i32
    %c0_i32_1 = arith.constant 0 : i32
    %c0_i32_2 = arith.constant 0 : i32
    return %c0_i32, %c0_i32_0, %c0_i32_1 : i32, i32, i32
  }
  func.func @transform_4(%arg0: i32) -> (i32, i32) {
    %c0_i32 = arith.constant 0 : i32
    %c0_i32_0 = arith.constant 0 : i32
    %c0_i32_1 = arith.constant 0 : i32
    return %c0_i32, %c0_i32_0 : i32, i32
  }
  func.func @transform_5(%arg0: i32) -> (i32, i32) {
    %c0_i32 = arith.constant 0 : i32
    %c0_i32_0 = arith.constant 0 : i32
    %c0_i32_1 = arith.constant 0 : i32
    return %c0_i32, %c0_i32_0 : i32, i32
  }
  func.func @transform_6(%arg0: i32) -> (i32, i32, i32) {
    %c0_i32 = arith.constant 0 : i32
    %c0_i32_0 = arith.constant 0 : i32
    %c0_i32_1 = arith.constant 0 : i32
    %c0_i32_2 = arith.constant 0 : i32
    return %c0_i32, %c0_i32_0, %c0_i32_1 : i32, i32, i32
  }
  func.func @transform_7(%arg0: i32) -> (i32, i32) {
    %c0_i32 = arith.constant 0 : i32
    %c0_i32_0 = arith.constant 0 : i32
    %c0_i32_1 = arith.constant 0 : i32
    return %c0_i32, %c0_i32_0 : i32, i32
  }
  func.func @transform_8(%arg0: i32) -> (i32, i32) {
    %c0_i32 = arith.constant 0 : i32
    %c0_i32_0 = arith.constant 0 : i32
    %c0_i32_1 = arith.constant 0 : i32
    return %c0_i32, %c0_i32_0 : i32, i32
  }
  func.func @transform_9(%arg0: i32) -> (i32, i32) {
    %c0_i32 = arith.constant 0 : i32
    %c0_i32_0 = arith.constant 0 : i32
    %c0_i32_1 = arith.constant 0 : i32
    return %c0_i32, %c0_i32_0 : i32, i32
  }
  func.func @transform_10(%arg0: i32) -> (i32, i32) {
    %c0_i32 = arith.constant 0 : i32
    %c0_i32_0 = arith.constant 0 : i32
    %c0_i32_1 = arith.constant 0 : i32
    return %c0_i32, %c0_i32_0 : i32, i32
  }
  func.func @transform_11(%arg0: i32) -> (i32, i32) {
    %c0_i32 = arith.constant 0 : i32
    %c0_i32_0 = arith.constant 0 : i32
    %c0_i32_1 = arith.constant 0 : i32
    return %c0_i32, %c0_i32_0 : i32, i32
  }
  func.func @transform_12(%arg0: i32) -> (i32, i32) {
    %c0_i32 = arith.constant 0 : i32
    %c0_i32_0 = arith.constant 0 : i32
    %c0_i32_1 = arith.constant 0 : i32
    return %c0_i32, %c0_i32_0 : i32, i32
  }
  func.func @transform_13(%arg0: i32) -> (i32, i32, i32) {
    %c0_i32 = arith.constant 0 : i32
    %c0_i32_0 = arith.constant 0 : i32
    %c0_i32_1 = arith.constant 0 : i32
    return %arg0, %c0_i32, %c0_i32_0 : i32, i32, i32
  }
}

</mosaic_0001>

<llo_original>
// kernel: connet_forward.1
$region0: #{connet_forward.1}
  #allocation0 [shape = 'u32[]', space=smem, size = 0x4, offset = 0x4, fixed_abs, tag = 'smem constant byte address 0x4 - core index']
  #allocation1 [shape = 'u32[144,128]{1,0:T(1,128)}', space=vmem, size = 0x12000, scoped, tag = 'internal scratch']
  #allocation2 [shape = 'f32[32,128]{1,0:T(8,128)}', space=vmem, size = 0x4000, scoped, tag = 'scratch operand']
  #allocation3 [shape = 'f32[16,128]{1,0:T(8,128)}', space=vmem, size = 0x2000, scoped, tag = 'scratch operand']
  #allocation4 [shape = 'f32[16,128]{1,0:T(8,128)}', space=vmem, size = 0x2000, scoped, tag = 'scratch operand']
  %s0 = inlined_call_operand.vmem [shape: bf16[64,128], index: 0, kind: input, shape index: {}]
  %s1 = inlined_call_operand.vmem [shape: bf16[640,168], index: 1, kind: input, shape index: {}]
  %s2 = inlined_call_operand.vmem [shape: f32[1,168], index: 2, kind: input, shape index: {}]
  %s3 = inlined_call_operand.vmem [shape: bf16[2,168,128], index: 3, kind: input, shape index: {}]
  %s4 = inlined_call_operand.vmem [shape: bf16[640,160], index: 4, kind: input, shape index: {}]
  %s5 = inlined_call_operand.vmem [shape: f32[1,160], index: 5, kind: input, shape index: {}]
  %s6 = inlined_call_operand.vmem [shape: bf16[2,160,128], index: 6, kind: input, shape index: {}]
  %s7 = inlined_call_operand.vmem [shape: bf16[640,128], index: 7, kind: input, shape index: {}]
  %s8 = inlined_call_operand.vmem [shape: f32[1,128], index: 8, kind: input, shape index: {}]
  %s9 = inlined_call_operand.vmem [shape: bf16[128,128], index: 9, kind: input, shape index: {}]
  %s10 = inlined_call_operand.vmem [shape: f32[1,128], index: 10, kind: input, shape index: {}]
  %s11 = inlined_call_operand.vmem [shape: bf16[128,128], index: 11, kind: input, shape index: {}]
  %s12 = inlined_call_operand.vmem [shape: f32[1,128], index: 12, kind: input, shape index: {}]
  %s13 = inlined_call_operand.hbm [shape: f32[2,1,128], index: 13, kind: output, shape index: {}]
  %s14 = sld [smem:[#allocation0]]
  $region85: #{connet_forward.1} parent=0
    _
  %s16 = ssub.s32 1, %s14
  %s17 = scalar_select 0, %s16, %s14
  $region1: #{connet_forward.1} parent=0
    #allocation5 [shape = 'u8[1024]{0}', space=vmem, size = 0x400, scoped, tag = 'output window, operand 0']
    #allocation6 [shape = 's32[2]{0}', space=sflag, size = 0x8, scoped, tag = 'scoped memory for connet_forward.1']
    %18 = vsyncpa [#allocation6], 0
    %s19 = scalar_lea.sflag [#allocation6], 1
    %20 = vsyncpa %s19, 0
    loop: start=0, step=1, limit=4
    $region2: #{connet_forward.1} parent=1 // loop_pre_header
      _
    $region3: #{connet_forward.1} parent=1 // loop_header
      %s22 = sphi 0, %s26
      %p23 = scmp.ge.s32.totalorder %s22, 4
      %s32 = sphi 0, %s34
      %s35 = sphi 0, %s32
      %s36 = sphi 0, %s35
      %s52 = sphi 0, %s36
      %s56 = sphi 0, %s56
      %s58 = sphi 0, %s56
      %s59 = sphi 0, %s58
      %s73 = sphi 0, %s59
      %s77 = sphi 0, %s77
      %s79 = sphi 0, %s77
      %s80 = sphi 0, %s79
      %s94 = sphi 0, %s80
      %s98 = sphi 0, %s98
      %s100 = sphi 0, %s98
      %s101 = sphi 0, %s100
      %s115 = sphi 0, %s101
      %s119 = sphi 0, %s119
      %s121 = sphi 0, %s119
      %s122 = sphi 0, %s121
      %s136 = sphi 0, %s122
      %s140 = sphi 0, %s140
      %s142 = sphi 0, %s140
      %s143 = sphi 0, %s142
      %s157 = sphi 0, %s143
      %s161 = sphi 0, %s161
      %s163 = sphi 0, %s161
      %s164 = sphi 0, %s163
      %s178 = sphi 0, %s164
      %s182 = sphi 0, %s182
      %s184 = sphi 0, %s182
      %s185 = sphi 0, %s184
      %s199 = sphi 0, %s185
      %s203 = sphi 0, %s203
      %s205 = sphi 0, %s203
      %s206 = sphi 0, %s205
      %s220 = sphi 0, %s206
      %s224 = sphi 0, %s224
      %s226 = sphi 0, %s224
      %s227 = sphi 0, %s226
      %s241 = sphi 0, %s227
      %s245 = sphi 0, %s245
      %s247 = sphi 0, %s245
      %s248 = sphi 0, %s247
      %s262 = sphi 0, %s248
      %s266 = sphi 0, %s266
      %s268 = sphi 0, %s266
      %s269 = sphi 0, %s268
      %s283 = sphi 0, %s269
      %s287 = sphi 0, %s287
      %s289 = sphi 0, %s287
      %s290 = sphi 0, %s289
      %s304 = sphi 0, %s290
      %s310 = sphi 0, %s312
      %s313 = sphi 0, %s310
      %s314 = sphi 0, %s313
      %s330 = sphi 0, %s314
    $region4: #{connet_forward.1} parent=1 // loop_header_branch
      %25 = sbr.rel (%p23) target = $region8
    $region5: #{connet_forward.1} parent=1 // loop_body
      %s27 = ssub.s32 %s22, 1
      %s28 = ssub.s32 %s22, 2
      %s29 = sadd.s32 %s22, 1
      %s30 = ssub.s32 %s22, %s29
      %p31 = scmp.eq.s32.totalorder %s30, 0
      %s33 = sadd.s32 %s32, 1
      %s34 = scalar_select %p31, %s32, %s33
      %p37 = pneg %p31
      %p38 = scmp.eq.s32.totalorder %s22, 1
      %p39 = por %p37, %p38
      %p40 = scmp.ne.s32.totalorder %s32, %s35
      %p41 = scmp.eq.s32.totalorder %s22, 0
      %p42 = por %p40, %p41
      %p43 = scmp.ne.s32.totalorder %s32, %s35
      %p44 = scmp.eq.s32.totalorder %s27, 1
      %p45 = por %p43, %p44
      %p46 = scmp.ne.s32.totalorder %s35, %s36
      %p47 = scmp.eq.s32.totalorder %s27, 0
      %p48 = por %p46, %p47
      %p49 = scmp.ne.s32.totalorder %s35, %s36
      %p50 = scmp.eq.s32.totalorder %s28, 1
      %p51 = por %p49, %p50
      %p53 = scmp.ne.s32.totalorder %s36, %s52
      %p54 = scmp.eq.s32.totalorder %s28, 0
      %p55 = por %p53, %p54
      %s57 = sadd.s32 %s56, 1
      %p60 = scmp.eq.s32.totalorder %s22, 1
      %p61 = scmp.ne.s32.totalorder %s56, %s58
      %p62 = scmp.eq.s32.totalorder %s22, 0
      %p63 = por %p61, %p62
      %p64 = scmp.ne.s32.totalorder %s56, %s58
      %p65 = scmp.eq.s32.totalorder %s27, 1
      %p66 = por %p64, %p65
      %p67 = scmp.ne.s32.totalorder %s58, %s59
      %p68 = scmp.eq.s32.totalorder %s27, 0
      %p69 = por %p67, %p68
      %p70 = scmp.ne.s32.totalorder %s58, %s59
      %p71 = scmp.eq.s32.totalorder %s28, 1
      %p72 = por %p70, %p71
      %p74 = scmp.ne.s32.totalorder %s59, %s73
      %p75 = scmp.eq.s32.totalorder %s28, 0
      %p76 = por %p74, %p75
      %s78 = sadd.s32 %s77, 1
      %p81 = scmp.eq.s32.totalorder %s22, 1
      %p82 = scmp.ne.s32.totalorder %s77, %s79
      %p83 = scmp.eq.s32.totalorder %s22, 0
      %p84 = por %p82, %p83
      %p85 = scmp.ne.s32.totalorder %s77, %s79
      %p86 = scmp.eq.s32.totalorder %s27, 1
      %p87 = por %p85, %p86
      %p88 = scmp.ne.s32.totalorder %s79, %s80
      %p89 = scmp.eq.s32.totalorder %s27, 0
      %p90 = por %p88, %p89
      %p91 = scmp.ne.s32.totalorder %s79, %s80
      %p92 = scmp.eq.s32.totalorder %s28, 1
      %p93 = por %p91, %p92
      %p95 = scmp.ne.s32.totalorder %s80, %s94
      %p96 = scmp.eq.s32.totalorder %s28, 0
      %p97 = por %p95, %p96
      %s99 = sadd.s32 %s98, 1
      %p102 = scmp.eq.s32.totalorder %s22, 1
      %p103 = scmp.ne.s32.totalorder %s98, %s100
      %p104 = scmp.eq.s32.totalorder %s22, 0
      %p105 = por %p103, %p104
      %p106 = scmp.ne.s32.totalorder %s98, %s100
      %p107 = scmp.eq.s32.totalorder %s27, 1
      %p108 = por %p106, %p107
      %p109 = scmp.ne.s32.totalorder %s100, %s101
      %p110 = scmp.eq.s32.totalorder %s27, 0
      %p111 = por %p109, %p110
      %p112 = scmp.ne.s32.totalorder %s100, %s101
      %p113 = scmp.eq.s32.totalorder %s28, 1
      %p114 = por %p112, %p113
      %p116 = scmp.ne.s32.totalorder %s101, %s115
      %p117 = scmp.eq.s32.totalorder %s28, 0
      %p118 = por %p116, %p117
      %s120 = sadd.s32 %s119, 1
      %p123 = scmp.eq.s32.totalorder %s22, 1
      %p124 = scmp.ne.s32.totalorder %s119, %s121
      %p125 = scmp.eq.s32.totalorder %s22, 0
      %p126 = por %p124, %p125
      %p127 = scmp.ne.s32.totalorder %s119, %s121
      %p128 = scmp.eq.s32.totalorder %s27, 1
      %p129 = por %p127, %p128
      %p130 = scmp.ne.s32.totalorder %s121, %s122
      %p131 = scmp.eq.s32.totalorder %s27, 0
      %p132 = por %p130, %p131
      %p133 = scmp.ne.s32.totalorder %s121, %s122
      %p134 = scmp.eq.s32.totalorder %s28, 1
      %p135 = por %p133, %p134
      %p137 = scmp.ne.s32.totalorder %s122, %s136
      %p138 = scmp.eq.s32.totalorder %s28, 0
      %p139 = por %p137, %p138
      %s141 = sadd.s32 %s140, 1
      %p144 = scmp.eq.s32.totalorder %s22, 1
      %p145 = scmp.ne.s32.totalorder %s140, %s142
      %p146 = scmp.eq.s32.totalorder %s22, 0
      %p147 = por %p145, %p146
      %p148 = scmp.ne.s32.totalorder %s140, %s142
      %p149 = scmp.eq.s32.totalorder %s27, 1
      %p150 = por %p148, %p149
      %p151 = scmp.ne.s32.totalorder %s142, %s143
      %p152 = scmp.eq.s32.totalorder %s27, 0
      %p153 = por %p151, %p152
      %p154 = scmp.ne.s32.totalorder %s142, %s143
      %p155 = scmp.eq.s32.totalorder %s28, 1
      %p156 = por %p154, %p155
      %p158 = scmp.ne.s32.totalorder %s143, %s157
      %p159 = scmp.eq.s32.totalorder %s28, 0
      %p160 = por %p158, %p159
      %s162 = sadd.s32 %s161, 1
      %p165 = scmp.eq.s32.totalorder %s22, 1
      %p166 = scmp.ne.s32.totalorder %s161, %s163
      %p167 = scmp.eq.s32.totalorder %s22, 0
      %p168 = por %p166, %p167
      %p169 = scmp.ne.s32.totalorder %s161, %s163
      %p170 = scmp.eq.s32.totalorder %s27, 1
      %p171 = por %p169, %p170
      %p172 = scmp.ne.s32.totalorder %s163, %s164
      %p173 = scmp.eq.s32.totalorder %s27, 0
      %p174 = por %p172, %p173
      %p175 = scmp.ne.s32.totalorder %s163, %s164
      %p176 = scmp.eq.s32.totalorder %s28, 1
      %p177 = por %p175, %p176
      %p179 = scmp.ne.s32.totalorder %s164, %s178
      %p180 = scmp.eq.s32.totalorder %s28, 0
      %p181 = por %p179, %p180
      %s183 = sadd.s32 %s182, 1
      %p186 = scmp.eq.s32.totalorder %s22, 1
      %p187 = scmp.ne.s32.totalorder %s182, %s184
      %p188 = scmp.eq.s32.totalorder %s22, 0
      %p189 = por %p187, %p188
      %p190 = scmp.ne.s32.totalorder %s182, %s184
      %p191 = scmp.eq.s32.totalorder %s27, 1
      %p192 = por %p190, %p191
      %p193 = scmp.ne.s32.totalorder %s184, %s185
      %p194 = scmp.eq.s32.totalorder %s27, 0
      %p195 = por %p193, %p194
      %p196 = scmp.ne.s32.totalorder %s184, %s185
      %p197 = scmp.eq.s32.totalorder %s28, 1
      %p198 = por %p196, %p197
      %p200 = scmp.ne.s32.totalorder %s185, %s199
      %p201 = scmp.eq.s32.totalorder %s28, 0
      %p202 = por %p200, %p201
      %s204 = sadd.s32 %s203, 1
      %p207 = scmp.eq.s32.totalorder %s22, 1
      %p208 = scmp.ne.s32.totalorder %s203, %s205
      %p209 = scmp.eq.s32.totalorder %s22, 0
      %p210 = por %p208, %p209
      %p211 = scmp.ne.s32.totalorder %s203, %s205
      %p212 = scmp.eq.s32.totalorder %s27, 1
      %p213 = por %p211, %p212
      %p214 = scmp.ne.s32.totalorder %s205, %s206
      %p215 = scmp.eq.s32.totalorder %s27, 0
      %p216 = por %p214, %p215
      %p217 = scmp.ne.s32.totalorder %s205, %s206
      %p218 = scmp.eq.s32.totalorder %s28, 1
      %p219 = por %p217, %p218
      %p221 = scmp.ne.s32.totalorder %s206, %s220
      %p222 = scmp.eq.s32.totalorder %s28, 0
      %p223 = por %p221, %p222
      %s225 = sadd.s32 %s224, 1
      %p228 = scmp.eq.s32.totalorder %s22, 1
      %p229 = scmp.ne.s32.totalorder %s224, %s226
      %p230 = scmp.eq.s32.totalorder %s22, 0
      %p231 = por %p229, %p230
      %p232 = scmp.ne.s32.totalorder %s224, %s226
      %p233 = scmp.eq.s32.totalorder %s27, 1
      %p234 = por %p232, %p233
      %p235 = scmp.ne.s32.totalorder %s226, %s227
      %p236 = scmp.eq.s32.totalorder %s27, 0
      %p237 = por %p235, %p236
      %p238 = scmp.ne.s32.totalorder %s226, %s227
      %p239 = scmp.eq.s32.totalorder %s28, 1
      %p240 = por %p238, %p239
      %p242 = scmp.ne.s32.totalorder %s227, %s241
      %p243 = scmp.eq.s32.totalorder %s28, 0
      %p244 = por %p242, %p243
      %s246 = sadd.s32 %s245, 1
      %p249 = scmp.eq.s32.totalorder %s22, 1
      %p250 = scmp.ne.s32.totalorder %s245, %s247
      %p251 = scmp.eq.s32.totalorder %s22, 0
      %p252 = por %p250, %p251
      %p253 = scmp.ne.s32.totalorder %s245, %s247
      %p254 = scmp.eq.s32.totalorder %s27, 1
      %p255 = por %p253, %p254
      %p256 = scmp.ne.s32.totalorder %s247, %s248
      %p257 = scmp.eq.s32.totalorder %s27, 0
      %p258 = por %p256, %p257
      %p259 = scmp.ne.s32.totalorder %s247, %s248
      %p260 = scmp.eq.s32.totalorder %s28, 1
      %p261 = por %p259, %p260
      %p263 = scmp.ne.s32.totalorder %s248, %s262
      %p264 = scmp.eq.s32.totalorder %s28, 0
      %p265 = por %p263, %p264
      %s267 = sadd.s32 %s266, 1
      %p270 = scmp.eq.s32.totalorder %s22, 1
      %p271 = scmp.ne.s32.totalorder %s266, %s268
      %p272 = scmp.eq.s32.totalorder %s22, 0
      %p273 = por %p271, %p272
      %p274 = scmp.ne.s32.totalorder %s266, %s268
      %p275 = scmp.eq.s32.totalorder %s27, 1
      %p276 = por %p274, %p275
      %p277 = scmp.ne.s32.totalorder %s268, %s269
      %p278 = scmp.eq.s32.totalorder %s27, 0
      %p279 = por %p277, %p278
      %p280 = scmp.ne.s32.totalorder %s268, %s269
      %p281 = scmp.eq.s32.totalorder %s28, 1
      %p282 = por %p280, %p281
      %p284 = scmp.ne.s32.totalorder %s269, %s283
      %p285 = scmp.eq.s32.totalorder %s28, 0
      %p286 = por %p284, %p285
      %s288 = sadd.s32 %s287, 1
      %p291 = scmp.eq.s32.totalorder %s22, 1
      %p292 = scmp.ne.s32.totalorder %s287, %s289
      %p293 = scmp.eq.s32.totalorder %s22, 0
      %p294 = por %p292, %p293
      %p295 = scmp.ne.s32.totalorder %s287, %s289
      %p296 = scmp.eq.s32.totalorder %s27, 1
      %p297 = por %p295, %p296
      %p298 = scmp.ne.s32.totalorder %s289, %s290
      %p299 = scmp.eq.s32.totalorder %s27, 0
      %p300 = por %p298, %p299
      %p301 = scmp.ne.s32.totalorder %s289, %s290
      %p302 = scmp.eq.s32.totalorder %s28, 1
      %p303 = por %p301, %p302
      %p305 = scmp.ne.s32.totalorder %s290, %s304
      %p306 = scmp.eq.s32.totalorder %s28, 0
      %p307 = por %p305, %p306
      %s308 = ssub.s32 %s22, %s29
      %p309 = scmp.eq.s32.totalorder %s308, 0
      %s311 = sadd.s32 %s310, 1
      %s312 = scalar_select %p309, %s310, %s311
      %p315 = pneg %p309
      %p316 = scmp.eq.s32.totalorder %s22, 1
      %p317 = por %p315, %p316
      %p318 = scmp.ne.s32.totalorder %s310, %s313
      %p319 = scmp.eq.s32.totalorder %s22, 0
      %p320 = por %p318, %p319
      %p321 = scmp.ne.s32.totalorder %s310, %s313
      %p322 = scmp.eq.s32.totalorder %s27, 1
      %p323 = por %p321, %p322
      %p324 = scmp.ne.s32.totalorder %s313, %s314
      %p325 = scmp.eq.s32.totalorder %s27, 0
      %p326 = por %p324, %p325
      %p327 = scmp.ne.s32.totalorder %s313, %s314
      %p328 = scmp.eq.s32.totalorder %s28, 1
      %p329 = por %p327, %p328
      %p331 = scmp.ne.s32.totalorder %s314, %s330
      %p332 = scmp.eq.s32.totalorder %s28, 0
      %p333 = por %p331, %p332
      %p334 = scmp.le.s32.totalorder 1, %s22
      %p335 = scmp.lt.s32.totalorder %s22, 3
      %p336 = pnand %p334, %p335
      %p337 = pneg %p336
      // Predicated region
      $region9: #{connet_forward.1} parent=5 // pred_check
        _
      $region10: #{connet_forward.1} parent=5 // pred_check_branch
        %339 = sbr.rel (%p336) target = $region12
      $region11: #{connet_forward.1} parent=5 // pred_region
        %s340 = ssub.s32 %s22, 1
        // Predicated region
        $region13: #{connet_forward.1} parent=11 // pred_check
          %p341 = pneg %p69
        $region14: #{connet_forward.1} parent=11 // pred_check_branch
          %343 = sbr.rel (%p341) target = $region16
        $region15: #{connet_forward.1} parent=11 // pred_region
          _
        $region16: #{connet_forward.1} parent=11 // pred_fallthru
          _
        // Predicated region
        $region17: #{connet_forward.1} parent=11 // pred_check
          %p344 = pneg %p90
        $region18: #{connet_forward.1} parent=11 // pred_check_branch
          %346 = sbr.rel (%p344) target = $region20
        $region19: #{connet_forward.1} parent=11 // pred_region
          _
        $region20: #{connet_forward.1} parent=11 // pred_fallthru
          _
        // Predicated region
        $region21: #{connet_forward.1} parent=11 // pred_check
          %p347 = pneg %p111
        $region22: #{connet_forward.1} parent=11 // pred_check_branch
          %349 = sbr.rel (%p347) target = $region24
        $region23: #{connet_forward.1} parent=11 // pred_region
          _
        $region24: #{connet_forward.1} parent=11 // pred_fallthru
          _
        // Predicated region
        $region25: #{connet_forward.1} parent=11 // pred_check
          %p350 = pneg %p132
        $region26: #{connet_forward.1} parent=11 // pred_check_branch
          %352 = sbr.rel (%p350) target = $region28
        $region27: #{connet_forward.1} parent=11 // pred_region
          _
        $region28: #{connet_forward.1} parent=11 // pred_fallthru
          _
        // Predicated region
        $region29: #{connet_forward.1} parent=11 // pred_check
          %p353 = pneg %p153
        $region30: #{connet_forward.1} parent=11 // pred_check_branch
          %355 = sbr.rel (%p353) target = $region32
        $region31: #{connet_forward.1} parent=11 // pred_region
          _
        $region32: #{connet_forward.1} parent=11 // pred_fallthru
          _
        // Predicated region
        $region33: #{connet_forward.1} parent=11 // pred_check
          %p356 = pneg %p174
        $region34: #{connet_forward.1} parent=11 // pred_check_branch
          %358 = sbr.rel (%p356) target = $region36
        $region35: #{connet_forward.1} parent=11 // pred_region
          _
        $region36: #{connet_forward.1} parent=11 // pred_fallthru
          _
        // Predicated region
        $region37: #{connet_forward.1} parent=11 // pred_check
          %p359 = pneg %p195
        $region38: #{connet_forward.1} parent=11 // pred_check_branch
          %361 = sbr.rel (%p359) target = $region40
        $region39: #{connet_forward.1} parent=11 // pred_region
          _
        $region40: #{connet_forward.1} parent=11 // pred_fallthru
          _
        // Predicated region
        $region41: #{connet_forward.1} parent=11 // pred_check
          %p362 = pneg %p216
        $region42: #{connet_forward.1} parent=11 // pred_check_branch
          %364 = sbr.rel (%p362) target = $region44
        $region43: #{connet_forward.1} parent=11 // pred_region
          _
        $region44: #{connet_forward.1} parent=11 // pred_fallthru
          _
        // Predicated region
        $region45: #{connet_forward.1} parent=11 // pred_check
          %p365 = pneg %p237
        $region46: #{connet_forward.1} parent=11 // pred_check_branch
          %367 = sbr.rel (%p365) target = $region48
        $region47: #{connet_forward.1} parent=11 // pred_region
          _
        $region48: #{connet_forward.1} parent=11 // pred_fallthru
          _
        // Predicated region
        $region49: #{connet_forward.1} parent=11 // pred_check
          %p368 = pneg %p258
        $region50: #{connet_forward.1} parent=11 // pred_check_branch
          %370 = sbr.rel (%p368) target = $region52
        $region51: #{connet_forward.1} parent=11 // pred_region
          _
        $region52: #{connet_forward.1} parent=11 // pred_fallthru
          _
        // Predicated region
        $region53: #{connet_forward.1} parent=11 // pred_check
          %p371 = pneg %p279
        $region54: #{connet_forward.1} parent=11 // pred_check_branch
          %373 = sbr.rel (%p371) target = $region56
        $region55: #{connet_forward.1} parent=11 // pred_region
          _
        $region56: #{connet_forward.1} parent=11 // pred_fallthru
          _
        // Predicated region
        $region57: #{connet_forward.1} parent=11 // pred_check
          %p374 = pneg %p300
        $region58: #{connet_forward.1} parent=11 // pred_check_branch
          %376 = sbr.rel (%p374) target = $region60
        $region59: #{connet_forward.1} parent=11 // pred_region
          _
        $region60: #{connet_forward.1} parent=11 // pred_fallthru
          _
      $region12: #{connet_forward.1} parent=5 // pred_fallthru
        _
      %p377 = scmp.lt.s32.totalorder %s22, 2
      // Predicated region
      $region61: #{connet_forward.1} parent=5 // pred_check
        %p378 = pneg %p377
      $region62: #{connet_forward.1} parent=5 // pred_check_branch
        %380 = sbr.rel (%p378) target = $region64
      $region63: #{connet_forward.1} parent=5 // pred_region
        // Predicated region
        $region65: #{connet_forward.1} parent=63 // pred_check
          %p381 = pneg %p42
        $region66: #{connet_forward.1} parent=63 // pred_check_branch
          %383 = sbr.rel (%p381) target = $region68
        $region67: #{connet_forward.1} parent=63 // pred_region
          %s384 = smul.u32 4, %s22
          %p385 = scmp.lt.s32.totalorder %s384, 7
          %s386 = scalar_select %p385, %s384, 7
          %s387 = smul.addr %s386, 4
          %s388 = scalar_lea.vmem %s0, %s387
          %s389 = smul.u32 4, %s22
        $region68: #{connet_forward.1} parent=63 // pred_fallthru
          _
      $region64: #{connet_forward.1} parent=5 // pred_fallthru
        _
      %p390 = scmp.le.s32.totalorder 1, %s22
      %p391 = scmp.lt.s32.totalorder %s22, 3
      %p392 = pnand %p390, %p391
      %p393 = pneg %p392
      // Predicated region
      $region69: #{connet_forward.1} parent=5 // pred_check
        _
      $region70: #{connet_forward.1} parent=5 // pred_check_branch
        %395 = sbr.rel (%p392) target = $region72
      $region71: #{connet_forward.1} parent=5 // pred_region
        %s396 = ssub.s32 %s22, 1
        %s397 = smul.u32 4, %s27
        %p398 = scmp.lt.s32.totalorder %s397, 7
        %s399 = scalar_select %p398, %s397, 7
        %s400 = smul.addr %s399, 4
        %s401 = scalar_lea.vmem %s0, %s400
        %p402 = pneg %p48
        %p403 = pneg %p45
        %p404 = pneg %p69
        %p405 = pneg %p66
        %p406 = pneg %p90
        %p407 = pneg %p87
        %p408 = pneg %p111
        %p409 = pneg %p108
        %p410 = pneg %p132
        %p411 = pneg %p129
        %p412 = pneg %p153
        %p413 = pneg %p150
        %p414 = pneg %p174
        %p415 = pneg %p171
        %p416 = pneg %p195
        %p417 = pneg %p192
        %p418 = pneg %p216
        %p419 = pneg %p213
        %p420 = pneg %p237
        %p421 = pneg %p234
        %p422 = pneg %p258
        %p423 = pneg %p255
        %p424 = pneg %p279
        %p425 = pneg %p276
        %p426 = pneg %p300
        %p427 = pneg %p297
        %p428 = pneg %p326
        %p429 = pneg %p323
        %s430 = sand.u32 %s313, 1
        %s431 = scalar_lea.sflag [#allocation6], %s430
        %s432 = sand.u32 %s313, 1
        %s433 = scalar_lea.vmem [#allocation5], %s432
        %s434 = smul.u32 4, %s27
        %p435 = scmp.lt.s32.totalorder %s434, 7
        %s436 = scalar_select %p435, %s434, 7
        %s437 = smul.addr %s436, 4
        %s438 = scalar_lea.vmem %s0, %s437
        %s439 = smul.u32 4, %s27
        %v441 = vld [vmem:[%s438] sm:$0xf]
        %v442 = vld [vmem:[%s438 + $0x4] sm:$0xf]
        %v443 = vld [vmem:[%s438 + $0x8] sm:$0xf]
        %v444 = vld [vmem:[%s438 + $0xc] sm:$0xf]
        %v445 = vunpack.c.l.bf16 %v441
        %v446 = vunpack.c.l.bf16 %v442
        %v447 = vunpack.c.l.bf16 %v443
        %v448 = vunpack.c.l.bf16 %v444
        %vm453 = vcmask 1046528
        %v454 = vrot.slane %v445, 1
        %v455 = vrot.slane %v446, 1
        %v456 = vsel %vm453, %v454, %v455
        %v457 = vrot.slane %v447, 1
        %v458 = vsel %vm453, %v455, %v457
        %v459 = vrot.slane %v448, 1
        %v460 = vsel %vm453, %v457, %v459
        %vm465 = vcmask 1045504
        %v466 = vrot.slane %v445, 2
        %v467 = vrot.slane %v446, 2
        %v468 = vsel %vm465, %v466, %v467
        %v469 = vrot.slane %v447, 2
        %v470 = vsel %vm465, %v467, %v469
        %v471 = vrot.slane %v448, 2
        %v472 = vsel %vm465, %v469, %v471
        %vm477 = vcmask 1044480
        %v478 = vrot.slane %v445, 3
        %v479 = vrot.slane %v446, 3
        %v480 = vsel %vm477, %v478, %v479
        %v481 = vrot.slane %v447, 3
        %v482 = vsel %vm477, %v479, %v481
        %v483 = vrot.slane %v448, 3
        %v484 = vsel %vm477, %v481, %v483
        %vm489 = vcmask 1043456
        %v490 = vrot.slane %v445, 4
        %v491 = vrot.slane %v446, 4
        %v492 = vsel %vm489, %v490, %v491
        %v493 = vrot.slane %v447, 4
        %v494 = vsel %vm489, %v491, %v493
        %v495 = vrot.slane %v448, 4
        %v496 = vsel %vm489, %v493, %v495
        %v501 = vpack.c.bf16 %v446, %v445
        %v502 = vpack.c.bf16 %v458, %v456
        %v503 = vpack.c.bf16 %v470, %v468
        %v504 = vpack.c.bf16 %v482, %v480
        %v505 = vpack.c.bf16 %v494, %v492
        %v506 = vpack.c.bf16 %v448, %v447
        %v507 = vpack.c.bf16 %v459, %v460
        %v508 = vpack.c.bf16 %v471, %v472
        %v509 = vpack.c.bf16 %v483, %v484
        %v510 = vpack.c.bf16 %v495, %v496
        %v511 = vld [vmem:[%s1] sm:$0xff]
        %v512 = vld [vmem:[%s1 + $0x8] sm:$0xff]
        %v513 = vld [vmem:[%s1 + $0x10] sm:$0xff]
        %v514 = vld [vmem:[%s1 + $0x18] sm:$0xff]
        %v515 = vld [vmem:[%s1 + $0x20] sm:$0xff]
        %v516 = vld [vmem:[%s1 + $0x28] sm:$0xff]
        %v517 = vld [vmem:[%s1 + $0x30] sm:$0xff]
        %v518 = vld [vmem:[%s1 + $0x38] sm:$0xff]
        %v519 = vld [vmem:[%s1 + $0x40] sm:$0xff]
        %v520 = vld [vmem:[%s1 + $0x48] sm:$0xff]
        %v521 = vld [vmem:[%s1 + $0x50] sm:$0xff]
        %v522 = vld [vmem:[%s1 + $0x58] sm:$0xff]
        %v523 = vld [vmem:[%s1 + $0x60] sm:$0xff]
        %v524 = vld [vmem:[%s1 + $0x68] sm:$0xff]
        %v525 = vld [vmem:[%s1 + $0x70] sm:$0xff]
        %v526 = vld [vmem:[%s1 + $0x78] sm:$0xff]
        %v527 = vld [vmem:[%s1 + $0x80] sm:$0xff]
        %v528 = vld [vmem:[%s1 + $0x88] sm:$0xff]
        %v529 = vld [vmem:[%s1 + $0x90] sm:$0xff]
        %v530 = vld [vmem:[%s1 + $0x98] sm:$0xff]
        %v531 = vld [vmem:[%s1 + $0xa0] sm:$0xff]
        %v532 = vld [vmem:[%s1 + $0xa8] sm:$0xff]
        %v533 = vld [vmem:[%s1 + $0xb0] sm:$0xff]
        %v534 = vld [vmem:[%s1 + $0xb8] sm:$0xff]
        %v535 = vld [vmem:[%s1 + $0xc0] sm:$0xff]
        %v536 = vld [vmem:[%s1 + $0xc8] sm:$0xff]
        %v537 = vld [vmem:[%s1 + $0xd0] sm:$0xff]
        %v538 = vld [vmem:[%s1 + $0xd8] sm:$0xff]
        %v539 = vld [vmem:[%s1 + $0xe0] sm:$0xff]
        %v540 = vld [vmem:[%s1 + $0xe8] sm:$0xff]
        %v541 = vld [vmem:[%s1 + $0xf0] sm:$0xff]
        %v542 = vld [vmem:[%s1 + $0xf8] sm:$0xff]
        %v543 = vld [vmem:[%s1 + $0x100] sm:$0xff]
        %v544 = vld [vmem:[%s1 + $0x108] sm:$0xff]
        %v545 = vld [vmem:[%s1 + $0x110] sm:$0xff]
        %v546 = vld [vmem:[%s1 + $0x118] sm:$0xff]
        %v547 = vld [vmem:[%s1 + $0x120] sm:$0xff]
        %v548 = vld [vmem:[%s1 + $0x128] sm:$0xff]
        %v549 = vld [vmem:[%s1 + $0x130] sm:$0xff]
        %v550 = vld [vmem:[%s1 + $0x138] sm:$0xff]
        %v551 = vld [vmem:[%s1 + $0x140] sm:$0xff]
        %v552 = vld [vmem:[%s1 + $0x148] sm:$0xff]
        %v553 = vld [vmem:[%s1 + $0x150] sm:$0xff]
        %v554 = vld [vmem:[%s1 + $0x158] sm:$0xff]
        %v555 = vld [vmem:[%s1 + $0x160] sm:$0xff]
        %v556 = vld [vmem:[%s1 + $0x168] sm:$0xff]
        %v557 = vld [vmem:[%s1 + $0x170] sm:$0xff]
        %v558 = vld [vmem:[%s1 + $0x178] sm:$0xff]
        %v559 = vld [vmem:[%s1 + $0x180] sm:$0xff]
        %v560 = vld [vmem:[%s1 + $0x188] sm:$0xff]
        %v561 = vld [vmem:[%s1 + $0x190] sm:$0xff]
        %v562 = vld [vmem:[%s1 + $0x198] sm:$0xff]
        %v563 = vld [vmem:[%s1 + $0x1a0] sm:$0xff]
        %v564 = vld [vmem:[%s1 + $0x1a8] sm:$0xff]
        %v565 = vld [vmem:[%s1 + $0x1b0] sm:$0xff]
        %v566 = vld [vmem:[%s1 + $0x1b8] sm:$0xff]
        %v567 = vld [vmem:[%s1 + $0x1c0] sm:$0xff]
        %v568 = vld [vmem:[%s1 + $0x1c8] sm:$0xff]
        %v569 = vld [vmem:[%s1 + $0x1d0] sm:$0xff]
        %v570 = vld [vmem:[%s1 + $0x1d8] sm:$0xff]
        %v571 = vld [vmem:[%s1 + $0x1e0] sm:$0xff]
        %v572 = vld [vmem:[%s1 + $0x1e8] sm:$0xff]
        %v573 = vld [vmem:[%s1 + $0x1f0] sm:$0xff]
        %v574 = vld [vmem:[%s1 + $0x1f8] sm:$0xff]
        %v575 = vld [vmem:[%s1 + $0x200] sm:$0xff]
        %v576 = vld [vmem:[%s1 + $0x208] sm:$0xff]
        %v577 = vld [vmem:[%s1 + $0x210] sm:$0xff]
        %v578 = vld [vmem:[%s1 + $0x218] sm:$0xff]
        %v579 = vld [vmem:[%s1 + $0x220] sm:$0xff]
        %v580 = vld [vmem:[%s1 + $0x228] sm:$0xff]
        %v581 = vld [vmem:[%s1 + $0x230] sm:$0xff]
        %v582 = vld [vmem:[%s1 + $0x238] sm:$0xff]
        %v583 = vld [vmem:[%s1 + $0x240] sm:$0xff]
        %v584 = vld [vmem:[%s1 + $0x248] sm:$0xff]
        %v585 = vld [vmem:[%s1 + $0x250] sm:$0xff]
        %v586 = vld [vmem:[%s1 + $0x258] sm:$0xff]
        %v587 = vld [vmem:[%s1 + $0x260] sm:$0xff]
        %v588 = vld [vmem:[%s1 + $0x268] sm:$0xff]
        %v589 = vld [vmem:[%s1 + $0x270] sm:$0xff]
        %v590 = vld [vmem:[%s1 + $0x278] sm:$0xff]
        %v591 = vld [vmem:[%s2] sm:$0x3]
        %v593 = vlaneseq
        %v594 = vshrl.u32 %v593, 7
        %v595 = vsub.s32 0, %v594
        %v596 = vrot.slane %v591, %v595
        %v597 = vlaneseq
        %v598 = vshrl.u32 %v597, 7
        %v599 = vsub.s32 1, %v598
        %v600 = vrot.slane %v591, %v599
        %v683 = vunpack.c.l.b16 %v511
        %v684 = vunpack.c.h.b16 %v511
        %v685 = vunpack.c.l.b16 %v512
        %v686 = vunpack.c.h.b16 %v512
        %v687 = vunpack.c.l.b16 %v513
        %v688 = vunpack.c.h.b16 %v513
        %v689 = vunpack.c.l.b16 %v514
        %v690 = vunpack.c.h.b16 %v514
        %v691 = vunpack.c.l.b16 %v515
        %v692 = vunpack.c.h.b16 %v515
        %v693 = vunpack.c.l.b16 %v516
        %v694 = vunpack.c.h.b16 %v516
        %v695 = vunpack.c.l.b16 %v517
        %v696 = vunpack.c.h.b16 %v517
        %v697 = vunpack.c.l.b16 %v518
        %v698 = vunpack.c.h.b16 %v518
        %v699 = vunpack.c.l.b16 %v519
        %v700 = vunpack.c.h.b16 %v519
        %v701 = vunpack.c.l.b16 %v520
        %v702 = vunpack.c.h.b16 %v520
        %v703 = vunpack.c.l.b16 %v521
        %v704 = vunpack.c.h.b16 %v521
        %v705 = vunpack.c.l.b16 %v522
        %v706 = vunpack.c.h.b16 %v522
        %v707 = vunpack.c.l.b16 %v523
        %v708 = vunpack.c.h.b16 %v523
        %v709 = vunpack.c.l.b16 %v524
        %v710 = vunpack.c.h.b16 %v524
        %v711 = vunpack.c.l.b16 %v525
        %v712 = vunpack.c.h.b16 %v525
        %v713 = vunpack.c.l.b16 %v526
        %v714 = vunpack.c.h.b16 %v526
        %v715 = vunpack.c.l.b16 %v527
        %v716 = vunpack.c.h.b16 %v527
        %v717 = vunpack.c.l.b16 %v528
        %v718 = vunpack.c.h.b16 %v528
        %v719 = vunpack.c.l.b16 %v529
        %v720 = vunpack.c.h.b16 %v529
        %v721 = vunpack.c.l.b16 %v530
        %v722 = vunpack.c.h.b16 %v530
        %v723 = vunpack.c.l.b16 %v531
        %v724 = vunpack.c.h.b16 %v531
        %v725 = vunpack.c.l.b16 %v532
        %v726 = vunpack.c.h.b16 %v532
        %v727 = vunpack.c.l.b16 %v533
        %v728 = vunpack.c.h.b16 %v533
        %v729 = vunpack.c.l.b16 %v534
        %v730 = vunpack.c.h.b16 %v534
        %v731 = vunpack.c.l.b16 %v535
        %v732 = vunpack.c.h.b16 %v535
        %v733 = vunpack.c.l.b16 %v536
        %v734 = vunpack.c.h.b16 %v536
        %v735 = vunpack.c.l.b16 %v537
        %v736 = vunpack.c.h.b16 %v537
        %v737 = vunpack.c.l.b16 %v538
        %v738 = vunpack.c.h.b16 %v538
        %v739 = vunpack.c.l.b16 %v539
        %v740 = vunpack.c.h.b16 %v539
        %v741 = vunpack.c.l.b16 %v540
        %v742 = vunpack.c.h.b16 %v540
        %v743 = vunpack.c.l.b16 %v541
        %v744 = vunpack.c.h.b16 %v541
        %v745 = vunpack.c.l.b16 %v542
        %v746 = vunpack.c.h.b16 %v542
        %v747 = vunpack.c.l.b16 %v543
        %v748 = vunpack.c.h.b16 %v543
        %v749 = vunpack.c.l.b16 %v544
        %v750 = vunpack.c.h.b16 %v544
        %v751 = vunpack.c.l.b16 %v545
        %v752 = vunpack.c.h.b16 %v545
        %v753 = vunpack.c.l.b16 %v546
        %v754 = vunpack.c.h.b16 %v546
        %v755 = vunpack.c.l.b16 %v547
        %v756 = vunpack.c.h.b16 %v547
        %v757 = vunpack.c.l.b16 %v548
        %v758 = vunpack.c.h.b16 %v548
        %v759 = vunpack.c.l.b16 %v549
        %v760 = vunpack.c.h.b16 %v549
        %v761 = vunpack.c.l.b16 %v550
        %v762 = vunpack.c.h.b16 %v550
        %v763 = vunpack.c.l.b16 %v551
        %v764 = vunpack.c.h.b16 %v551
        %v765 = vunpack.c.l.b16 %v552
        %v766 = vunpack.c.h.b16 %v552
        %v767 = vunpack.c.l.b16 %v553
        %v768 = vunpack.c.h.b16 %v553
        %v769 = vunpack.c.l.b16 %v554
        %v770 = vunpack.c.h.b16 %v554
        %v771 = vunpack.c.l.b16 %v555
        %v772 = vunpack.c.h.b16 %v555
        %v773 = vunpack.c.l.b16 %v556
        %v774 = vunpack.c.h.b16 %v556
        %v775 = vunpack.c.l.b16 %v557
        %v776 = vunpack.c.h.b16 %v557
        %v777 = vunpack.c.l.b16 %v558
        %v778 = vunpack.c.h.b16 %v558
        %v779 = vunpack.c.l.b16 %v559
        %v780 = vunpack.c.h.b16 %v559
        %v781 = vunpack.c.l.b16 %v560
        %v782 = vunpack.c.h.b16 %v560
        %v783 = vunpack.c.l.b16 %v561
        %v784 = vunpack.c.h.b16 %v561
        %v785 = vunpack.c.l.b16 %v562
        %v786 = vunpack.c.h.b16 %v562
        %v787 = vunpack.c.l.b16 %v563
        %v788 = vunpack.c.h.b16 %v563
        %v789 = vunpack.c.l.b16 %v564
        %v790 = vunpack.c.h.b16 %v564
        %v791 = vunpack.c.l.b16 %v565
        %v792 = vunpack.c.h.b16 %v565
        %v793 = vunpack.c.l.b16 %v566
        %v794 = vunpack.c.h.b16 %v566
        %v795 = vunpack.c.l.b16 %v567
        %v796 = vunpack.c.h.b16 %v567
        %v797 = vunpack.c.l.b16 %v568
        %v798 = vunpack.c.h.b16 %v568
        %v799 = vunpack.c.l.b16 %v569
        %v800 = vunpack.c.h.b16 %v569
        %v801 = vunpack.c.l.b16 %v570
        %v802 = vunpack.c.h.b16 %v570
        %v803 = vunpack.c.l.b16 %v571
        %v804 = vunpack.c.h.b16 %v571
        %v805 = vunpack.c.l.b16 %v572
        %v806 = vunpack.c.h.b16 %v572
        %v807 = vunpack.c.l.b16 %v573
        %v808 = vunpack.c.h.b16 %v573
        %v809 = vunpack.c.l.b16 %v574
        %v810 = vunpack.c.h.b16 %v574
        %v811 = vunpack.c.l.b16 %v575
        %v812 = vunpack.c.h.b16 %v575
        %v813 = vunpack.c.l.b16 %v576
        %v814 = vunpack.c.h.b16 %v576
        %v815 = vunpack.c.l.b16 %v577
        %v816 = vunpack.c.h.b16 %v577
        %v817 = vunpack.c.l.b16 %v578
        %v818 = vunpack.c.h.b16 %v578
        %v819 = vunpack.c.l.b16 %v579
        %v820 = vunpack.c.h.b16 %v579
        %v821 = vunpack.c.l.b16 %v580
        %v822 = vunpack.c.h.b16 %v580
        %v823 = vunpack.c.l.b16 %v581
        %v824 = vunpack.c.h.b16 %v581
        %v825 = vunpack.c.l.b16 %v582
        %v826 = vunpack.c.h.b16 %v582
        %v827 = vunpack.c.l.b16 %v583
        %v828 = vunpack.c.h.b16 %v583
        %v829 = vunpack.c.l.b16 %v584
        %v830 = vunpack.c.h.b16 %v584
        %v831 = vunpack.c.l.b16 %v585
        %v832 = vunpack.c.h.b16 %v585
        %v833 = vunpack.c.l.b16 %v586
        %v834 = vunpack.c.h.b16 %v586
        %v835 = vunpack.c.l.b16 %v587
        %v836 = vunpack.c.h.b16 %v587
        %v837 = vunpack.c.l.b16 %v588
        %v838 = vunpack.c.h.b16 %v588
        %v839 = vunpack.c.l.b16 %v589
        %v840 = vunpack.c.h.b16 %v589
        %v841 = vunpack.c.l.b16 %v590
        %v842 = vunpack.c.h.b16 %v590
        %v843 = vpack.c.b16 %v685, %v683
        %v844 = vpack.c.b16 %v686, %v684
        %v845 = vpack.c.b16 %v689, %v687
        %v846 = vpack.c.b16 %v690, %v688
        %v847 = vpack.c.b16 %v693, %v691
        %v848 = vpack.c.b16 %v694, %v692
        %v849 = vpack.c.b16 %v697, %v695
        %v850 = vpack.c.b16 %v698, %v696
        %v851 = vpack.c.b16 %v701, %v699
        %v852 = vpack.c.b16 %v702, %v700
        %v853 = vpack.c.b16 %v705, %v703
        %v854 = vpack.c.b16 %v706, %v704
        %v855 = vpack.c.b16 %v709, %v707
        %v856 = vpack.c.b16 %v710, %v708
        %v857 = vpack.c.b16 %v713, %v711
        %v858 = vpack.c.b16 %v714, %v712
        %v859 = vpack.c.b16 %v717, %v715
        %v860 = vpack.c.b16 %v718, %v716
        %v861 = vpack.c.b16 %v721, %v719
        %v862 = vpack.c.b16 %v722, %v720
        %v863 = vpack.c.b16 %v725, %v723
        %v864 = vpack.c.b16 %v726, %v724
        %v865 = vpack.c.b16 %v729, %v727
        %v866 = vpack.c.b16 %v730, %v728
        %v867 = vpack.c.b16 %v733, %v731
        %v868 = vpack.c.b16 %v734, %v732
        %v869 = vpack.c.b16 %v737, %v735
        %v870 = vpack.c.b16 %v738, %v736
        %v871 = vpack.c.b16 %v741, %v739
        %v872 = vpack.c.b16 %v742, %v740
        %v873 = vpack.c.b16 %v745, %v743
        %v874 = vpack.c.b16 %v746, %v744
        %v875 = vpack.c.b16 %v749, %v747
        %v876 = vpack.c.b16 %v750, %v748
        %v877 = vpack.c.b16 %v753, %v751
        %v878 = vpack.c.b16 %v754, %v752
        %v879 = vpack.c.b16 %v757, %v755
        %v880 = vpack.c.b16 %v758, %v756
        %v881 = vpack.c.b16 %v761, %v759
        %v882 = vpack.c.b16 %v762, %v760
        %v883 = vpack.c.b16 %v765, %v763
        %v884 = vpack.c.b16 %v766, %v764
        %v885 = vpack.c.b16 %v769, %v767
        %v886 = vpack.c.b16 %v770, %v768
        %v887 = vpack.c.b16 %v773, %v771
        %v888 = vpack.c.b16 %v774, %v772
        %v889 = vpack.c.b16 %v777, %v775
        %v890 = vpack.c.b16 %v778, %v776
        %v891 = vpack.c.b16 %v781, %v779
        %v892 = vpack.c.b16 %v782, %v780
        %v893 = vpack.c.b16 %v785, %v783
        %v894 = vpack.c.b16 %v786, %v784
        %v895 = vpack.c.b16 %v789, %v787
        %v896 = vpack.c.b16 %v790, %v788
        %v897 = vpack.c.b16 %v793, %v791
        %v898 = vpack.c.b16 %v794, %v792
        %v899 = vpack.c.b16 %v797, %v795
        %v900 = vpack.c.b16 %v798, %v796
        %v901 = vpack.c.b16 %v801, %v799
        %v902 = vpack.c.b16 %v802, %v800
        %v903 = vpack.c.b16 %v805, %v803
        %v904 = vpack.c.b16 %v806, %v804
        %v905 = vpack.c.b16 %v809, %v807
        %v906 = vpack.c.b16 %v810, %v808
        %v907 = vpack.c.b16 %v813, %v811
        %v908 = vpack.c.b16 %v814, %v812
        %v909 = vpack.c.b16 %v817, %v815
        %v910 = vpack.c.b16 %v818, %v816
        %v911 = vpack.c.b16 %v821, %v819
        %v912 = vpack.c.b16 %v822, %v820
        %v913 = vpack.c.b16 %v825, %v823
        %v914 = vpack.c.b16 %v826, %v824
        %v915 = vpack.c.b16 %v829, %v827
        %v916 = vpack.c.b16 %v830, %v828
        %v917 = vpack.c.b16 %v833, %v831
        %v918 = vpack.c.b16 %v834, %v832
        %v919 = vpack.c.b16 %v837, %v835
        %v920 = vpack.c.b16 %v838, %v836
        %v921 = vpack.c.b16 %v841, %v839
        %v922 = vpack.c.b16 %v842, %v840
        %1003 = vmatprep.subr.bf16.mxu0 %v844
        %1004 = vmatpush1.bf16.msra.mxu0 %v843
        %1005 = vmatprep.subr.bf16.mxu0 %v846
        %1006 = vmatpush1.bf16.msra.mxu0 %v845
        %1007 = vmatprep.subr.bf16.mxu0 %v848
        %1008 = vmatpush1.bf16.msra.mxu0 %v847
        %1009 = vmatprep.subr.bf16.mxu0 %v850
        %1010 = vmatpush1.bf16.msra.mxu0 %v849
        %1011 = vmatprep.subr.bf16.mxu0 %v852
        %1012 = vmatpush1.bf16.msra.mxu0 %v851
        %1013 = vmatprep.subr.bf16.mxu0 %v854
        %1014 = vmatpush1.bf16.msra.mxu0 %v853
        %1015 = vmatprep.subr.bf16.mxu0 %v856
        %1016 = vmatpush1.bf16.msra.mxu0 %v855
        %1017 = vmatprep.subr.bf16.mxu0 %v858
        %1018 = vmatpush1.bf16.msra.mxu0 %v857
        %1019 = vmatprep.subr.bf16.mxu0 %v860
        %1020 = vmatpush1.bf16.msra.mxu0 %v859
        %1021 = vmatprep.subr.bf16.mxu0 %v862
        %1022 = vmatpush1.bf16.msra.mxu0 %v861
        %1023 = vmatprep.subr.bf16.mxu0 %v864
        %1024 = vmatpush1.bf16.msra.mxu0 %v863
        %1025 = vmatprep.subr.bf16.mxu0 %v866
        %1026 = vmatpush1.bf16.msra.mxu0 %v865
        %1027 = vmatprep.subr.bf16.mxu0 %v868
        %1028 = vmatpush1.bf16.msra.mxu0 %v867
        %1029 = vmatprep.subr.bf16.mxu0 %v870
        %1030 = vmatpush1.bf16.msra.mxu0 %v869
        %1031 = vmatprep.subr.bf16.mxu0 %v872
        %1032 = vmatpush1.bf16.msra.mxu0 %v871
        %1033 = vmatprep.subr.bf16.mxu0 %v874
        %1034 = vmatpush1.bf16.msra.mxu0 %v873
        %1035 = vmatprep.mubr.bf16.mxu0 %v502
        %1036 = vmatmul.mubr.bf16.gmra.mrb[0].mxu0 %v501
        %v1037 = vpop.f32.mrb[0].mxu0
        %v1038 = vadd.f32 %v596, %v1037
        %v1039 = vpop.f32.mrb[0].mxu0
        %v1040 = vadd.f32 %v600, %v1039
        %v1041 = vpop.f32.mrb[0].mxu0
        %v1042 = vadd.f32 %v596, %v1041
        %v1043 = vpop.f32.mrb[0].mxu0
        %v1044 = vadd.f32 %v600, %v1043
        %1045 = vmatprep.mubr.bf16.mxu0 %v507
        %1046 = vmatmul.mubr.bf16.gmra.mrb[0].mxu0 %v506
        %v1047 = vpop.f32.mrb[0].mxu0
        %v1048 = vadd.f32 %v596, %v1047
        %v1049 = vpop.f32.mrb[0].mxu0
        %v1050 = vadd.f32 %v600, %v1049
        %v1051 = vpop.f32.mrb[0].mxu0
        %v1052 = vadd.f32 %v596, %v1051
        %v1053 = vpop.f32.mrb[0].mxu0
        %v1054 = vadd.f32 %v600, %v1053
        %1055 = vdwg.mxu0
        %1056 = vmatprep.subr.bf16.mxu0 %v876
        %1057 = vmatpush1.bf16.msra.mxu0 %v875
        %1058 = vmatprep.subr.bf16.mxu0 %v878
        %1059 = vmatpush1.bf16.msra.mxu0 %v877
        %1060 = vmatprep.subr.bf16.mxu0 %v880
        %1061 = vmatpush1.bf16.msra.mxu0 %v879
        %1062 = vmatprep.subr.bf16.mxu0 %v882
        %1063 = vmatpush1.bf16.msra.mxu0 %v881
        %1064 = vmatprep.subr.bf16.mxu0 %v884
        %1065 = vmatpush1.bf16.msra.mxu0 %v883
        %1066 = vmatprep.subr.bf16.mxu0 %v886
        %1067 = vmatpush1.bf16.msra.mxu0 %v885
        %1068 = vmatprep.subr.bf16.mxu0 %v888
        %1069 = vmatpush1.bf16.msra.mxu0 %v887
        %1070 = vmatprep.subr.bf16.mxu0 %v890
        %1071 = vmatpush1.bf16.msra.mxu0 %v889
        %1072 = vmatprep.subr.bf16.mxu0 %v892
        %1073 = vmatpush1.bf16.msra.mxu0 %v891
        %1074 = vmatprep.subr.bf16.mxu0 %v894
        %1075 = vmatpush1.bf16.msra.mxu0 %v893
        %1076 = vmatprep.subr.bf16.mxu0 %v896
        %1077 = vmatpush1.bf16.msra.mxu0 %v895
        %1078 = vmatprep.subr.bf16.mxu0 %v898
        %1079 = vmatpush1.bf16.msra.mxu0 %v897
        %1080 = vmatprep.subr.bf16.mxu0 %v900
        %1081 = vmatpush1.bf16.msra.mxu0 %v899
        %1082 = vmatprep.subr.bf16.mxu0 %v902
        %1083 = vmatpush1.bf16.msra.mxu0 %v901
        %1084 = vmatprep.subr.bf16.mxu0 %v904
        %1085 = vmatpush1.bf16.msra.mxu0 %v903
        %1086 = vmatprep.subr.bf16.mxu0 %v906
        %1087 = vmatpush1.bf16.msra.mxu0 %v905
        %1088 = vmatprep.mubr.bf16.mxu0 %v504
        %1089 = vmatmul.mubr.bf16.gmra.mrb[0].mxu0 %v503
        %v1090 = vpop.f32.mrb[0].mxu0
        %v1091 = vadd.f32 %v1038, %v1090
        %v1092 = vpop.f32.mrb[0].mxu0
        %v1093 = vadd.f32 %v1040, %v1092
        %v1094 = vpop.f32.mrb[0].mxu0
        %v1095 = vadd.f32 %v1042, %v1094
        %v1096 = vpop.f32.mrb[0].mxu0
        %v1097 = vadd.f32 %v1044, %v1096
        %1098 = vmatprep.mubr.bf16.mxu0 %v509
        %1099 = vmatmul.mubr.bf16.gmra.mrb[0].mxu0 %v508
        %v1100 = vpop.f32.mrb[0].mxu0
        %v1101 = vadd.f32 %v1048, %v1100
        %v1102 = vpop.f32.mrb[0].mxu0
        %v1103 = vadd.f32 %v1050, %v1102
        %v1104 = vpop.f32.mrb[0].mxu0
        %v1105 = vadd.f32 %v1052, %v1104
        %v1106 = vpop.f32.mrb[0].mxu0
        %v1107 = vadd.f32 %v1054, %v1106
        %1108 = vdwg.mxu0
        %1109 = vmatprep.subr.bf16.mxu0 %v908
        %1110 = vmatpush1.bf16.msra.mxu0 %v907
        %1111 = vmatprep.subr.bf16.mxu0 %v910
        %1112 = vmatpush1.bf16.msra.mxu0 %v909
        %1113 = vmatprep.subr.bf16.mxu0 %v912
        %1114 = vmatpush1.bf16.msra.mxu0 %v911
        %1115 = vmatprep.subr.bf16.mxu0 %v914
        %1116 = vmatpush1.bf16.msra.mxu0 %v913
        %1117 = vmatprep.subr.bf16.mxu0 %v916
        %1118 = vmatpush1.bf16.msra.mxu0 %v915
        %1119 = vmatprep.subr.bf16.mxu0 %v918
        %1120 = vmatpush1.bf16.msra.mxu0 %v917
        %1121 = vmatprep.subr.bf16.mxu0 %v920
        %1122 = vmatpush1.bf16.msra.mxu0 %v919
        %1123 = vmatprep.subr.bf16.mxu0 %v922
        %1124 = vmatpush1.bf16.msra.mxu0 %v921
        %1125 = vmatprep.subr.bf16.mxu0 0
        %1126 = vmatpush1.bf16.msra.mxu0 0
        %1127 = vmatprep.subr.bf16.mxu0 0
        %1128 = vmatpush1.bf16.msra.mxu0 0
        %1129 = vmatprep.subr.bf16.mxu0 0
        %1130 = vmatpush1.bf16.msra.mxu0 0
        %1131 = vmatprep.subr.bf16.mxu0 0
        %1132 = vmatpush1.bf16.msra.mxu0 0
        %1133 = vmatprep.subr.bf16.mxu0 0
        %1134 = vmatpush1.bf16.msra.mxu0 0
        %1135 = vmatprep.subr.bf16.mxu0 0
        %1136 = vmatpush1.bf16.msra.mxu0 0
        %1137 = vmatprep.subr.bf16.mxu0 0
        %1138 = vmatpush1.bf16.msra.mxu0 0
        %1139 = vmatprep.subr.bf16.mxu0 0
        %1140 = vmatpush1.bf16.msra.mxu0 0
        %1141 = vmatprep.mubr.bf16.mxu0 0
        %1142 = vmatmul.mubr.bf16.gmra.mrb[0].mxu0 %v505
        %v1143 = vpop.f32.mrb[0].mxu0
        %v1144 = vadd.f32 %v1091, %v1143
        %v1145 = vpop.f32.mrb[0].mxu0
        %v1146 = vadd.f32 %v1093, %v1145
        %v1147 = vpop.f32.mrb[0].mxu0
        %v1148 = vadd.f32 %v1095, %v1147
        %v1149 = vpop.f32.mrb[0].mxu0
        %v1150 = vadd.f32 %v1097, %v1149
        %1151 = vmatprep.mubr.bf16.mxu0 0
        %1152 = vmatmul.mubr.bf16.gmra.mrb[0].mxu0 %v510
        %v1153 = vpop.f32.mrb[0].mxu0
        %v1154 = vadd.f32 %v1101, %v1153
        %v1155 = vpop.f32.mrb[0].mxu0
        %v1156 = vadd.f32 %v1103, %v1155
        %v1157 = vpop.f32.mrb[0].mxu0
        %v1158 = vadd.f32 %v1105, %v1157
        %v1159 = vpop.f32.mrb[0].mxu0
        %v1160 = vadd.f32 %v1107, %v1159
        %1161 = vdwg.mxu0
        %v1162 = vmax.f32 %v1144, 0.0
        %v1163 = vmax.f32 %v1146, 0.0
        %v1164 = vmax.f32 %v1148, 0.0
        %v1165 = vmax.f32 %v1150, 0.0
        %v1166 = vmax.f32 %v1154, 0.0
        %v1167 = vmax.f32 %v1156, 0.0
        %v1168 = vmax.f32 %v1158, 0.0
        %v1169 = vmax.f32 %v1160, 0.0
        %v1170 = vpack.c.bf16 %v1164, %v1162
        %v1171 = vpack.c.bf16 %v1165, %v1163
        %v1172 = vpack.c.bf16 %v1168, %v1166
        %v1173 = vpack.c.bf16 %v1169, %v1167
        %v1174 = vld [vmem:[%s3] sm:$0xf]
        %v1175 = vld [vmem:[%s3 + $0x4] sm:$0xf]
        %v1176 = vld [vmem:[%s3 + $0x8] sm:$0xf]
        %v1177 = vld [vmem:[%s3 + $0xc] sm:$0xf]
        %v1178 = vld [vmem:[%s3 + $0x10] sm:$0xf]
        %v1179 = vld [vmem:[%s3 + $0x14] sm:$0xf]
        %v1180 = vld [vmem:[%s3 + $0x18] sm:$0xf]
        %v1181 = vld [vmem:[%s3 + $0x1c] sm:$0xf]
        %v1182 = vld [vmem:[%s3 + $0x20] sm:$0xf]
        %v1183 = vld [vmem:[%s3 + $0x24] sm:$0xf]
        %v1184 = vld [vmem:[%s3 + $0x28] sm:$0xf]
        %v1185 = vld [vmem:[%s3 + $0x2c] sm:$0xf]
        %v1186 = vld [vmem:[%s3 + $0x30] sm:$0xf]
        %v1187 = vld [vmem:[%s3 + $0x34] sm:$0xf]
        %v1188 = vld [vmem:[%s3 + $0x38] sm:$0xf]
        %v1189 = vld [vmem:[%s3 + $0x3c] sm:$0xf]
        %v1190 = vld [vmem:[%s3 + $0x40] sm:$0xf]
        %v1191 = vld [vmem:[%s3 + $0x44] sm:$0xf]
        %v1192 = vld [vmem:[%s3 + $0x48] sm:$0xf]
        %v1193 = vld [vmem:[%s3 + $0x4c] sm:$0xf]
        %v1194 = vld [vmem:[%s3 + $0x50] sm:$0xf]
        %v1216 = vunpack.c.l.b16 %v1174
        %v1217 = vunpack.c.l.b16 %v1175
        %v1218 = vunpack.c.l.b16 %v1176
        %v1219 = vunpack.c.l.b16 %v1177
        %v1220 = vunpack.c.l.b16 %v1178
        %v1221 = vunpack.c.l.b16 %v1179
        %v1222 = vunpack.c.l.b16 %v1180
        %v1223 = vunpack.c.l.b16 %v1181
        %v1224 = vunpack.c.l.b16 %v1182
        %v1225 = vunpack.c.l.b16 %v1183
        %v1226 = vunpack.c.l.b16 %v1184
        %v1227 = vunpack.c.l.b16 %v1185
        %v1228 = vunpack.c.l.b16 %v1186
        %v1229 = vunpack.c.l.b16 %v1187
        %v1230 = vunpack.c.l.b16 %v1188
        %v1231 = vunpack.c.l.b16 %v1189
        %v1232 = vunpack.c.l.b16 %v1190
        %v1233 = vunpack.c.l.b16 %v1191
        %v1234 = vunpack.c.l.b16 %v1192
        %v1235 = vunpack.c.l.b16 %v1193
        %v1236 = vunpack.c.l.b16 %v1194
        %v1237 = vpack.c.b16 %v1217, %v1216
        %v1238 = vpack.c.b16 %v1219, %v1218
        %v1239 = vpack.c.b16 %v1221, %v1220
        %v1240 = vpack.c.b16 %v1223, %v1222
        %v1241 = vpack.c.b16 %v1225, %v1224
        %v1242 = vpack.c.b16 %v1227, %v1226
        %v1243 = vpack.c.b16 %v1229, %v1228
        %v1244 = vpack.c.b16 %v1231, %v1230
        %v1245 = vpack.c.b16 %v1233, %v1232
        %v1246 = vpack.c.b16 %v1235, %v1234
        %v1247 = vpack.c.b16 %v1236, %v1236
        %vm1258 = vcmask 326656
        %v1260 = vsel %vm1258, %v1171, 0
        %v1263 = vsel %vm1258, %v1173, 0
        %v1266 = vsel %vm489, %v1247, 0
        %1268 = vmatprep.subr.bf16.mxu0 0
        %1269 = vmatpush1.bf16.msra.mxu0 %v1237
        %1270 = vmatprep.subr.bf16.mxu0 0
        %1271 = vmatpush1.bf16.msra.mxu0 %v1238
        %1272 = vmatprep.subr.bf16.mxu0 0
        %1273 = vmatpush1.bf16.msra.mxu0 %v1239
        %1274 = vmatprep.subr.bf16.mxu0 0
        %1275 = vmatpush1.bf16.msra.mxu0 %v1240
        %1276 = vmatprep.subr.bf16.mxu0 0
        %1277 = vmatpush1.bf16.msra.mxu0 %v1241
        %1278 = vmatprep.subr.bf16.mxu0 0
        %1279 = vmatpush1.bf16.msra.mxu0 %v1242
        %1280 = vmatprep.subr.bf16.mxu0 0
        %1281 = vmatpush1.bf16.msra.mxu0 %v1243
        %1282 = vmatprep.subr.bf16.mxu0 0
        %1283 = vmatpush1.bf16.msra.mxu0 %v1244
        %1284 = vmatprep.subr.bf16.mxu0 0
        %1285 = vmatpush1.bf16.msra.mxu0 %v1245
        %1286 = vmatprep.subr.bf16.mxu0 0
        %1287 = vmatpush1.bf16.msra.mxu0 %v1246
        %1288 = vmatprep.subr.bf16.mxu0 0
        %1289 = vmatpush1.bf16.msra.mxu0 %v1266
        %1290 = vmatprep.subr.bf16.mxu0 0
        %1291 = vmatpush1.bf16.msra.mxu0 0
        %1292 = vmatprep.subr.bf16.mxu0 0
        %1293 = vmatpush1.bf16.msra.mxu0 0
        %1294 = vmatprep.subr.bf16.mxu0 0
        %1295 = vmatpush1.bf16.msra.mxu0 0
        %1296 = vmatprep.subr.bf16.mxu0 0
        %1297 = vmatpush1.bf16.msra.mxu0 0
        %1298 = vmatprep.subr.bf16.mxu0 0
        %1299 = vmatpush1.bf16.msra.mxu0 0
        %1300 = vmatprep.mubr.bf16.mxu0 %v1260
        %1301 = vmatmul.mubr.bf16.gmra.mrb[0].mxu0 %v1170
        %v1302 = vpop.f32.mrb[0].mxu0
        %v1303 = vadd.f32 0.0, %v1302
        %v1304 = vpop.f32.mrb[0].mxu0
        %v1305 = vpop.f32.mrb[0].mxu0
        %v1306 = vadd.f32 0.0, %v1305
        %v1307 = vpop.f32.mrb[0].mxu0
        %1308 = vmatprep.mubr.bf16.mxu0 %v1263
        %1309 = vmatmul.mubr.bf16.gmra.mrb[0].mxu0 %v1172
        %v1310 = vpop.f32.mrb[0].mxu0
        %v1311 = vadd.f32 0.0, %v1310
        %v1312 = vpop.f32.mrb[0].mxu0
        %v1313 = vpop.f32.mrb[0].mxu0
        %v1314 = vadd.f32 0.0, %v1313
        %v1315 = vpop.f32.mrb[0].mxu0
        %1316 = vdwg.mxu0
        %s1317 = scalar_lea.vmem %s3, 84
        %v1318 = vld [vmem:[%s1317] sm:$0xf]
        %v1319 = vld [vmem:[%s1317 + $0x4] sm:$0xf]
        %v1320 = vld [vmem:[%s1317 + $0x8] sm:$0xf]
        %v1321 = vld [vmem:[%s1317 + $0xc] sm:$0xf]
        %v1322 = vld [vmem:[%s1317 + $0x10] sm:$0xf]
        %v1323 = vld [vmem:[%s1317 + $0x14] sm:$0xf]
        %v1324 = vld [vmem:[%s1317 + $0x18] sm:$0xf]
        %v1325 = vld [vmem:[%s1317 + $0x1c] sm:$0xf]
        %v1326 = vld [vmem:[%s1317 + $0x20] sm:$0xf]
        %v1327 = vld [vmem:[%s1317 + $0x24] sm:$0xf]
        %v1328 = vld [vmem:[%s1317 + $0x28] sm:$0xf]
        %v1329 = vld [vmem:[%s1317 + $0x2c] sm:$0xf]
        %v1330 = vld [vmem:[%s1317 + $0x30] sm:$0xf]
        %v1331 = vld [vmem:[%s1317 + $0x34] sm:$0xf]
        %v1332 = vld [vmem:[%s1317 + $0x38] sm:$0xf]
        %v1333 = vld [vmem:[%s1317 + $0x3c] sm:$0xf]
        %v1334 = vld [vmem:[%s1317 + $0x40] sm:$0xf]
        %v1335 = vld [vmem:[%s1317 + $0x44] sm:$0xf]
        %v1336 = vld [vmem:[%s1317 + $0x48] sm:$0xf]
        %v1337 = vld [vmem:[%s1317 + $0x4c] sm:$0xf]
        %v1338 = vld [vmem:[%s1317 + $0x50] sm:$0xf]
        %v1360 = vunpack.c.l.b16 %v1318
        %v1361 = vunpack.c.l.b16 %v1319
        %v1362 = vunpack.c.l.b16 %v1320
        %v1363 = vunpack.c.l.b16 %v1321
        %v1364 = vunpack.c.l.b16 %v1322
        %v1365 = vunpack.c.l.b16 %v1323
        %v1366 = vunpack.c.l.b16 %v1324
        %v1367 = vunpack.c.l.b16 %v1325
        %v1368 = vunpack.c.l.b16 %v1326
        %v1369 = vunpack.c.l.b16 %v1327
        %v1370 = vunpack.c.l.b16 %v1328
        %v1371 = vunpack.c.l.b16 %v1329
        %v1372 = vunpack.c.l.b16 %v1330
        %v1373 = vunpack.c.l.b16 %v1331
        %v1374 = vunpack.c.l.b16 %v1332
        %v1375 = vunpack.c.l.b16 %v1333
        %v1376 = vunpack.c.l.b16 %v1334
        %v1377 = vunpack.c.l.b16 %v1335
        %v1378 = vunpack.c.l.b16 %v1336
        %v1379 = vunpack.c.l.b16 %v1337
        %v1380 = vunpack.c.l.b16 %v1338
        %v1381 = vpack.c.b16 %v1361, %v1360
        %v1382 = vpack.c.b16 %v1363, %v1362
        %v1383 = vpack.c.b16 %v1365, %v1364
        %v1384 = vpack.c.b16 %v1367, %v1366
        %v1385 = vpack.c.b16 %v1369, %v1368
        %v1386 = vpack.c.b16 %v1371, %v1370
        %v1387 = vpack.c.b16 %v1373, %v1372
        %v1388 = vpack.c.b16 %v1375, %v1374
        %v1389 = vpack.c.b16 %v1377, %v1376
        %v1390 = vpack.c.b16 %v1379, %v1378
        %v1391 = vpack.c.b16 %v1380, %v1380
        %v1403 = vsel %vm489, %v1391, 0
        %1405 = vmatprep.subr.bf16.mxu0 0
        %1406 = vmatpush1.bf16.msra.mxu0 %v1381
        %1407 = vmatprep.subr.bf16.mxu0 0
        %1408 = vmatpush1.bf16.msra.mxu0 %v1382
        %1409 = vmatprep.subr.bf16.mxu0 0
        %1410 = vmatpush1.bf16.msra.mxu0 %v1383
        %1411 = vmatprep.subr.bf16.mxu0 0
        %1412 = vmatpush1.bf16.msra.mxu0 %v1384
        %1413 = vmatprep.subr.bf16.mxu0 0
        %1414 = vmatpush1.bf16.msra.mxu0 %v1385
        %1415 = vmatprep.subr.bf16.mxu0 0
        %1416 = vmatpush1.bf16.msra.mxu0 %v1386
        %1417 = vmatprep.subr.bf16.mxu0 0
        %1418 = vmatpush1.bf16.msra.mxu0 %v1387
        %1419 = vmatprep.subr.bf16.mxu0 0
        %1420 = vmatpush1.bf16.msra.mxu0 %v1388
        %1421 = vmatprep.subr.bf16.mxu0 0
        %1422 = vmatpush1.bf16.msra.mxu0 %v1389
        %1423 = vmatprep.subr.bf16.mxu0 0
        %1424 = vmatpush1.bf16.msra.mxu0 %v1390
        %1425 = vmatprep.subr.bf16.mxu0 0
        %1426 = vmatpush1.bf16.msra.mxu0 %v1403
        %1427 = vmatprep.subr.bf16.mxu0 0
        %1428 = vmatpush1.bf16.msra.mxu0 0
        %1429 = vmatprep.subr.bf16.mxu0 0
        %1430 = vmatpush1.bf16.msra.mxu0 0
        %1431 = vmatprep.subr.bf16.mxu0 0
        %1432 = vmatpush1.bf16.msra.mxu0 0
        %1433 = vmatprep.subr.bf16.mxu0 0
        %1434 = vmatpush1.bf16.msra.mxu0 0
        %1435 = vmatprep.subr.bf16.mxu0 0
        %1436 = vmatpush1.bf16.msra.mxu0 0
        %1437 = vmatprep.mubr.bf16.mxu0 %v1260
        %1438 = vmatmul.mubr.bf16.gmra.mrb[0].mxu0 %v1170
        %v1439 = vpop.f32.mrb[0].mxu0
        %v1440 = vadd.f32 0.0, %v1439
        %v1441 = vpop.f32.mrb[0].mxu0
        %v1442 = vpop.f32.mrb[0].mxu0
        %v1443 = vadd.f32 0.0, %v1442
        %v1444 = vpop.f32.mrb[0].mxu0
        %1445 = vmatprep.mubr.bf16.mxu0 %v1263
        %1446 = vmatmul.mubr.bf16.gmra.mrb[0].mxu0 %v1172
        %v1447 = vpop.f32.mrb[0].mxu0
        %v1448 = vadd.f32 0.0, %v1447
        %v1449 = vpop.f32.mrb[0].mxu0
        %v1450 = vpop.f32.mrb[0].mxu0
        %v1451 = vadd.f32 0.0, %v1450
        %v1452 = vpop.f32.mrb[0].mxu0
        %1453 = vdwg.mxu0
        %v1454 = vmax.f32 %v1303, %v1440
        %v1455 = vmax.f32 %v1306, %v1443
        %v1456 = vmax.f32 %v1311, %v1448
        %v1457 = vmax.f32 %v1314, %v1451
        %1458 = vst [vmem:[#allocation2] sm:$0xff] %v1454
        %1459 = vst [vmem:[#allocation2 + $0x8] sm:$0xff] %v1455
        %1460 = vst [vmem:[#allocation2 + $0x10] sm:$0xff] %v1456
        %1461 = vst [vmem:[#allocation2 + $0x18] sm:$0xf] %v1457
        %1462 = vst [vmem:[#allocation2 + $0x1c] sm:$0xf] 0.0
        %v1463 = vld [vmem:[#allocation2] ss:$2 sm:$0xff]
        %s1464 = scalar_lea.vmem [#allocation2], 16
        %v1465 = vld [vmem:[%s1464] ss:$2 sm:$0xff]
        %s1466 = scalar_lea.vmem [#allocation2], 1
        %v1467 = vld [vmem:[%s1466] ss:$2 sm:$0xff]
        %s1468 = scalar_lea.vmem [#allocation2], 17
        %v1469 = vld [vmem:[%s1468] ss:$2 sm:$0xff]
        %v1470 = vmax.f32 %v1463, %v1467
        %v1471 = vmax.f32 %v1465, %v1469
        %1472 = vst [vmem:[#allocation3] sm:$0xff] %v1470
        %1473 = vst [vmem:[#allocation3 + $0x8] sm:$0xff] %v1471
        %v1474 = vld [vmem:[#allocation3] sm:$0xff]
        %v1475 = vld [vmem:[#allocation3 + $0x8] sm:$0xff]
        %v1478 = vrot.slane %v1474, 1
        %v1479 = vrot.slane %v1475, 1
        %v1480 = vsel %vm453, %v1478, %v1479
        %v1483 = vrot.slane %v1474, 2
        %v1484 = vrot.slane %v1475, 2
        %v1485 = vsel %vm465, %v1483, %v1484
        %v1488 = vrot.slane %v1474, 3
        %v1489 = vrot.slane %v1475, 3
        %v1490 = vsel %vm477, %v1488, %v1489
        %v1493 = vrot.slane %v1474, 4
        %v1494 = vrot.slane %v1475, 4
        %v1495 = vsel %vm489, %v1493, %v1494
        %v1498 = vpack.c.bf16 %v1475, %v1474
        %v1499 = vpack.c.bf16 %v1479, %v1480
        %v1500 = vpack.c.bf16 %v1484, %v1485
        %v1501 = vpack.c.bf16 %v1489, %v1490
        %v1502 = vpack.c.bf16 %v1494, %v1495
        %v1503 = vld [vmem:[%s4] sm:$0xff]
        %v1504 = vld [vmem:[%s4 + $0x8] sm:$0xff]
        %v1505 = vld [vmem:[%s4 + $0x10] sm:$0xff]
        %v1506 = vld [vmem:[%s4 + $0x18] sm:$0xff]
        %v1507 = vld [vmem:[%s4 + $0x20] sm:$0xff]
        %v1508 = vld [vmem:[%s4 + $0x28] sm:$0xff]
        %v1509 = vld [vmem:[%s4 + $0x30] sm:$0xff]
        %v1510 = vld [vmem:[%s4 + $0x38] sm:$0xff]
        %v1511 = vld [vmem:[%s4 + $0x40] sm:$0xff]
        %v1512 = vld [vmem:[%s4 + $0x48] sm:$0xff]
        %v1513 = vld [vmem:[%s4 + $0x50] sm:$0xff]
        %v1514 = vld [vmem:[%s4 + $0x58] sm:$0xff]
        %v1515 = vld [vmem:[%s4 + $0x60] sm:$0xff]
        %v1516 = vld [vmem:[%s4 + $0x68] sm:$0xff]
        %v1517 = vld [vmem:[%s4 + $0x70] sm:$0xff]
        %v1518 = vld [vmem:[%s4 + $0x78] sm:$0xff]
        %v1519 = vld [vmem:[%s4 + $0x80] sm:$0xff]
        %v1520 = vld [vmem:[%s4 + $0x88] sm:$0xff]
        %v1521 = vld [vmem:[%s4 + $0x90] sm:$0xff]
        %v1522 = vld [vmem:[%s4 + $0x98] sm:$0xff]
        %v1523 = vld [vmem:[%s4 + $0xa0] sm:$0xff]
        %v1524 = vld [vmem:[%s4 + $0xa8] sm:$0xff]
        %v1525 = vld [vmem:[%s4 + $0xb0] sm:$0xff]
        %v1526 = vld [vmem:[%s4 + $0xb8] sm:$0xff]
        %v1527 = vld [vmem:[%s4 + $0xc0] sm:$0xff]
        %v1528 = vld [vmem:[%s4 + $0xc8] sm:$0xff]
        %v1529 = vld [vmem:[%s4 + $0xd0] sm:$0xff]
        %v1530 = vld [vmem:[%s4 + $0xd8] sm:$0xff]
        %v1531 = vld [vmem:[%s4 + $0xe0] sm:$0xff]
        %v1532 = vld [vmem:[%s4 + $0xe8] sm:$0xff]
        %v1533 = vld [vmem:[%s4 + $0xf0] sm:$0xff]
        %v1534 = vld [vmem:[%s4 + $0xf8] sm:$0xff]
        %v1535 = vld [vmem:[%s4 + $0x100] sm:$0xff]
        %v1536 = vld [vmem:[%s4 + $0x108] sm:$0xff]
        %v1537 = vld [vmem:[%s4 + $0x110] sm:$0xff]
        %v1538 = vld [vmem:[%s4 + $0x118] sm:$0xff]
        %v1539 = vld [vmem:[%s4 + $0x120] sm:$0xff]
        %v1540 = vld [vmem:[%s4 + $0x128] sm:$0xff]
        %v1541 = vld [vmem:[%s4 + $0x130] sm:$0xff]
        %v1542 = vld [vmem:[%s4 + $0x138] sm:$0xff]
        %v1543 = vld [vmem:[%s4 + $0x140] sm:$0xff]
        %v1544 = vld [vmem:[%s4 + $0x148] sm:$0xff]
        %v1545 = vld [vmem:[%s4 + $0x150] sm:$0xff]
        %v1546 = vld [vmem:[%s4 + $0x158] sm:$0xff]
        %v1547 = vld [vmem:[%s4 + $0x160] sm:$0xff]
        %v1548 = vld [vmem:[%s4 + $0x168] sm:$0xff]
        %v1549 = vld [vmem:[%s4 + $0x170] sm:$0xff]
        %v1550 = vld [vmem:[%s4 + $0x178] sm:$0xff]
        %v1551 = vld [vmem:[%s4 + $0x180] sm:$0xff]
        %v1552 = vld [vmem:[%s4 + $0x188] sm:$0xff]
        %v1553 = vld [vmem:[%s4 + $0x190] sm:$0xff]
        %v1554 = vld [vmem:[%s4 + $0x198] sm:$0xff]
        %v1555 = vld [vmem:[%s4 + $0x1a0] sm:$0xff]
        %v1556 = vld [vmem:[%s4 + $0x1a8] sm:$0xff]
        %v1557 = vld [vmem:[%s4 + $0x1b0] sm:$0xff]
        %v1558 = vld [vmem:[%s4 + $0x1b8] sm:$0xff]
        %v1559 = vld [vmem:[%s4 + $0x1c0] sm:$0xff]
        %v1560 = vld [vmem:[%s4 + $0x1c8] sm:$0xff]
        %v1561 = vld [vmem:[%s4 + $0x1d0] sm:$0xff]
        %v1562 = vld [vmem:[%s4 + $0x1d8] sm:$0xff]
        %v1563 = vld [vmem:[%s4 + $0x1e0] sm:$0xff]
        %v1564 = vld [vmem:[%s4 + $0x1e8] sm:$0xff]
        %v1565 = vld [vmem:[%s4 + $0x1f0] sm:$0xff]
        %v1566 = vld [vmem:[%s4 + $0x1f8] sm:$0xff]
        %v1567 = vld [vmem:[%s4 + $0x200] sm:$0xff]
        %v1568 = vld [vmem:[%s4 + $0x208] sm:$0xff]
        %v1569 = vld [vmem:[%s4 + $0x210] sm:$0xff]
        %v1570 = vld [vmem:[%s4 + $0x218] sm:$0xff]
        %v1571 = vld [vmem:[%s4 + $0x220] sm:$0xff]
        %v1572 = vld [vmem:[%s4 + $0x228] sm:$0xff]
        %v1573 = vld [vmem:[%s4 + $0x230] sm:$0xff]
        %v1574 = vld [vmem:[%s4 + $0x238] sm:$0xff]
        %v1575 = vld [vmem:[%s4 + $0x240] sm:$0xff]
        %v1576 = vld [vmem:[%s4 + $0x248] sm:$0xff]
        %v1577 = vld [vmem:[%s4 + $0x250] sm:$0xff]
        %v1578 = vld [vmem:[%s4 + $0x258] sm:$0xff]
        %v1579 = vld [vmem:[%s4 + $0x260] sm:$0xff]
        %v1580 = vld [vmem:[%s4 + $0x268] sm:$0xff]
        %v1581 = vld [vmem:[%s4 + $0x270] sm:$0xff]
        %v1582 = vld [vmem:[%s4 + $0x278] sm:$0xff]
        %v1583 = vld [vmem:[%s5] sm:$0x3]
        %v1585 = vlaneseq
        %v1586 = vshrl.u32 %v1585, 7
        %v1587 = vsub.s32 0, %v1586
        %v1588 = vrot.slane %v1583, %v1587
        %v1589 = vlaneseq
        %v1590 = vshrl.u32 %v1589, 7
        %v1591 = vsub.s32 1, %v1590
        %v1592 = vrot.slane %v1583, %v1591
        %v1675 = vunpack.c.l.b16 %v1503
        %v1676 = vunpack.c.h.b16 %v1503
        %v1677 = vunpack.c.l.b16 %v1504
        %v1678 = vunpack.c.h.b16 %v1504
        %v1679 = vunpack.c.l.b16 %v1505
        %v1680 = vunpack.c.h.b16 %v1505
        %v1681 = vunpack.c.l.b16 %v1506
        %v1682 = vunpack.c.h.b16 %v1506
        %v1683 = vunpack.c.l.b16 %v1507
        %v1684 = vunpack.c.h.b16 %v1507
        %v1685 = vunpack.c.l.b16 %v1508
        %v1686 = vunpack.c.h.b16 %v1508
        %v1687 = vunpack.c.l.b16 %v1509
        %v1688 = vunpack.c.h.b16 %v1509
        %v1689 = vunpack.c.l.b16 %v1510
        %v1690 = vunpack.c.h.b16 %v1510
        %v1691 = vunpack.c.l.b16 %v1511
        %v1692 = vunpack.c.h.b16 %v1511
        %v1693 = vunpack.c.l.b16 %v1512
        %v1694 = vunpack.c.h.b16 %v1512
        %v1695 = vunpack.c.l.b16 %v1513
        %v1696 = vunpack.c.h.b16 %v1513
        %v1697 = vunpack.c.l.b16 %v1514
        %v1698 = vunpack.c.h.b16 %v1514
        %v1699 = vunpack.c.l.b16 %v1515
        %v1700 = vunpack.c.h.b16 %v1515
        %v1701 = vunpack.c.l.b16 %v1516
        %v1702 = vunpack.c.h.b16 %v1516
        %v1703 = vunpack.c.l.b16 %v1517
        %v1704 = vunpack.c.h.b16 %v1517
        %v1705 = vunpack.c.l.b16 %v1518
        %v1706 = vunpack.c.h.b16 %v1518
        %v1707 = vunpack.c.l.b16 %v1519
        %v1708 = vunpack.c.h.b16 %v1519
        %v1709 = vunpack.c.l.b16 %v1520
        %v1710 = vunpack.c.h.b16 %v1520
        %v1711 = vunpack.c.l.b16 %v1521
        %v1712 = vunpack.c.h.b16 %v1521
        %v1713 = vunpack.c.l.b16 %v1522
        %v1714 = vunpack.c.h.b16 %v1522
        %v1715 = vunpack.c.l.b16 %v1523
        %v1716 = vunpack.c.h.b16 %v1523
        %v1717 = vunpack.c.l.b16 %v1524
        %v1718 = vunpack.c.h.b16 %v1524
        %v1719 = vunpack.c.l.b16 %v1525
        %v1720 = vunpack.c.h.b16 %v1525
        %v1721 = vunpack.c.l.b16 %v1526
        %v1722 = vunpack.c.h.b16 %v1526
        %v1723 = vunpack.c.l.b16 %v1527
        %v1724 = vunpack.c.h.b16 %v1527
        %v1725 = vunpack.c.l.b16 %v1528
        %v1726 = vunpack.c.h.b16 %v1528
        %v1727 = vunpack.c.l.b16 %v1529
        %v1728 = vunpack.c.h.b16 %v1529
        %v1729 = vunpack.c.l.b16 %v1530
        %v1730 = vunpack.c.h.b16 %v1530
        %v1731 = vunpack.c.l.b16 %v1531
        %v1732 = vunpack.c.h.b16 %v1531
        %v1733 = vunpack.c.l.b16 %v1532
        %v1734 = vunpack.c.h.b16 %v1532
        %v1735 = vunpack.c.l.b16 %v1533
        %v1736 = vunpack.c.h.b16 %v1533
        %v1737 = vunpack.c.l.b16 %v1534
        %v1738 = vunpack.c.h.b16 %v1534
        %v1739 = vunpack.c.l.b16 %v1535
        %v1740 = vunpack.c.h.b16 %v1535
        %v1741 = vunpack.c.l.b16 %v1536
        %v1742 = vunpack.c.h.b16 %v1536
        %v1743 = vunpack.c.l.b16 %v1537
        %v1744 = vunpack.c.h.b16 %v1537
        %v1745 = vunpack.c.l.b16 %v1538
        %v1746 = vunpack.c.h.b16 %v1538
        %v1747 = vunpack.c.l.b16 %v1539
        %v1748 = vunpack.c.h.b16 %v1539
        %v1749 = vunpack.c.l.b16 %v1540
        %v1750 = vunpack.c.h.b16 %v1540
        %v1751 = vunpack.c.l.b16 %v1541
        %v1752 = vunpack.c.h.b16 %v1541
        %v1753 = vunpack.c.l.b16 %v1542
        %v1754 = vunpack.c.h.b16 %v1542
        %v1755 = vunpack.c.l.b16 %v1543
        %v1756 = vunpack.c.h.b16 %v1543
        %v1757 = vunpack.c.l.b16 %v1544
        %v1758 = vunpack.c.h.b16 %v1544
        %v1759 = vunpack.c.l.b16 %v1545
        %v1760 = vunpack.c.h.b16 %v1545
        %v1761 = vunpack.c.l.b16 %v1546
        %v1762 = vunpack.c.h.b16 %v1546
        %v1763 = vunpack.c.l.b16 %v1547
        %v1764 = vunpack.c.h.b16 %v1547
        %v1765 = vunpack.c.l.b16 %v1548
        %v1766 = vunpack.c.h.b16 %v1548
        %v1767 = vunpack.c.l.b16 %v1549
        %v1768 = vunpack.c.h.b16 %v1549
        %v1769 = vunpack.c.l.b16 %v1550
        %v1770 = vunpack.c.h.b16 %v1550
        %v1771 = vunpack.c.l.b16 %v1551
        %v1772 = vunpack.c.h.b16 %v1551
        %v1773 = vunpack.c.l.b16 %v1552
        %v1774 = vunpack.c.h.b16 %v1552
        %v1775 = vunpack.c.l.b16 %v1553
        %v1776 = vunpack.c.h.b16 %v1553
        %v1777 = vunpack.c.l.b16 %v1554
        %v1778 = vunpack.c.h.b16 %v1554
        %v1779 = vunpack.c.l.b16 %v1555
        %v1780 = vunpack.c.h.b16 %v1555
        %v1781 = vunpack.c.l.b16 %v1556
        %v1782 = vunpack.c.h.b16 %v1556
        %v1783 = vunpack.c.l.b16 %v1557
        %v1784 = vunpack.c.h.b16 %v1557
        %v1785 = vunpack.c.l.b16 %v1558
        %v1786 = vunpack.c.h.b16 %v1558
        %v1787 = vunpack.c.l.b16 %v1559
        %v1788 = vunpack.c.h.b16 %v1559
        %v1789 = vunpack.c.l.b16 %v1560
        %v1790 = vunpack.c.h.b16 %v1560
        %v1791 = vunpack.c.l.b16 %v1561
        %v1792 = vunpack.c.h.b16 %v1561
        %v1793 = vunpack.c.l.b16 %v1562
        %v1794 = vunpack.c.h.b16 %v1562
        %v1795 = vunpack.c.l.b16 %v1563
        %v1796 = vunpack.c.h.b16 %v1563
        %v1797 = vunpack.c.l.b16 %v1564
        %v1798 = vunpack.c.h.b16 %v1564
        %v1799 = vunpack.c.l.b16 %v1565
        %v1800 = vunpack.c.h.b16 %v1565
        %v1801 = vunpack.c.l.b16 %v1566
        %v1802 = vunpack.c.h.b16 %v1566
        %v1803 = vunpack.c.l.b16 %v1567
        %v1804 = vunpack.c.h.b16 %v1567
        %v1805 = vunpack.c.l.b16 %v1568
        %v1806 = vunpack.c.h.b16 %v1568
        %v1807 = vunpack.c.l.b16 %v1569
        %v1808 = vunpack.c.h.b16 %v1569
        %v1809 = vunpack.c.l.b16 %v1570
        %v1810 = vunpack.c.h.b16 %v1570
        %v1811 = vunpack.c.l.b16 %v1571
        %v1812 = vunpack.c.h.b16 %v1571
        %v1813 = vunpack.c.l.b16 %v1572
        %v1814 = vunpack.c.h.b16 %v1572
        %v1815 = vunpack.c.l.b16 %v1573
        %v1816 = vunpack.c.h.b16 %v1573
        %v1817 = vunpack.c.l.b16 %v1574
        %v1818 = vunpack.c.h.b16 %v1574
        %v1819 = vunpack.c.l.b16 %v1575
        %v1820 = vunpack.c.h.b16 %v1575
        %v1821 = vunpack.c.l.b16 %v1576
        %v1822 = vunpack.c.h.b16 %v1576
        %v1823 = vunpack.c.l.b16 %v1577
        %v1824 = vunpack.c.h.b16 %v1577
        %v1825 = vunpack.c.l.b16 %v1578
        %v1826 = vunpack.c.h.b16 %v1578
        %v1827 = vunpack.c.l.b16 %v1579
        %v1828 = vunpack.c.h.b16 %v1579
        %v1829 = vunpack.c.l.b16 %v1580
        %v1830 = vunpack.c.h.b16 %v1580
        %v1831 = vunpack.c.l.b16 %v1581
        %v1832 = vunpack.c.h.b16 %v1581
        %v1833 = vunpack.c.l.b16 %v1582
        %v1834 = vunpack.c.h.b16 %v1582
        %v1835 = vpack.c.b16 %v1677, %v1675
        %v1836 = vpack.c.b16 %v1678, %v1676
        %v1837 = vpack.c.b16 %v1681, %v1679
        %v1838 = vpack.c.b16 %v1682, %v1680
        %v1839 = vpack.c.b16 %v1685, %v1683
        %v1840 = vpack.c.b16 %v1686, %v1684
        %v1841 = vpack.c.b16 %v1689, %v1687
        %v1842 = vpack.c.b16 %v1690, %v1688
        %v1843 = vpack.c.b16 %v1693, %v1691
        %v1844 = vpack.c.b16 %v1694, %v1692
        %v1845 = vpack.c.b16 %v1697, %v1695
        %v1846 = vpack.c.b16 %v1698, %v1696
        %v1847 = vpack.c.b16 %v1701, %v1699
        %v1848 = vpack.c.b16 %v1702, %v1700
        %v1849 = vpack.c.b16 %v1705, %v1703
        %v1850 = vpack.c.b16 %v1706, %v1704
        %v1851 = vpack.c.b16 %v1709, %v1707
        %v1852 = vpack.c.b16 %v1710, %v1708
        %v1853 = vpack.c.b16 %v1713, %v1711
        %v1854 = vpack.c.b16 %v1714, %v1712
        %v1855 = vpack.c.b16 %v1717, %v1715
        %v1856 = vpack.c.b16 %v1718, %v1716
        %v1857 = vpack.c.b16 %v1721, %v1719
        %v1858 = vpack.c.b16 %v1722, %v1720
        %v1859 = vpack.c.b16 %v1725, %v1723
        %v1860 = vpack.c.b16 %v1726, %v1724
        %v1861 = vpack.c.b16 %v1729, %v1727
        %v1862 = vpack.c.b16 %v1730, %v1728
        %v1863 = vpack.c.b16 %v1733, %v1731
        %v1864 = vpack.c.b16 %v1734, %v1732
        %v1865 = vpack.c.b16 %v1737, %v1735
        %v1866 = vpack.c.b16 %v1738, %v1736
        %v1867 = vpack.c.b16 %v1741, %v1739
        %v1868 = vpack.c.b16 %v1742, %v1740
        %v1869 = vpack.c.b16 %v1745, %v1743
        %v1870 = vpack.c.b16 %v1746, %v1744
        %v1871 = vpack.c.b16 %v1749, %v1747
        %v1872 = vpack.c.b16 %v1750, %v1748
        %v1873 = vpack.c.b16 %v1753, %v1751
        %v1874 = vpack.c.b16 %v1754, %v1752
        %v1875 = vpack.c.b16 %v1757, %v1755
        %v1876 = vpack.c.b16 %v1758, %v1756
        %v1877 = vpack.c.b16 %v1761, %v1759
        %v1878 = vpack.c.b16 %v1762, %v1760
        %v1879 = vpack.c.b16 %v1765, %v1763
        %v1880 = vpack.c.b16 %v1766, %v1764
        %v1881 = vpack.c.b16 %v1769, %v1767
        %v1882 = vpack.c.b16 %v1770, %v1768
        %v1883 = vpack.c.b16 %v1773, %v1771
        %v1884 = vpack.c.b16 %v1774, %v1772
        %v1885 = vpack.c.b16 %v1777, %v1775
        %v1886 = vpack.c.b16 %v1778, %v1776
        %v1887 = vpack.c.b16 %v1781, %v1779
        %v1888 = vpack.c.b16 %v1782, %v1780
        %v1889 = vpack.c.b16 %v1785, %v1783
        %v1890 = vpack.c.b16 %v1786, %v1784
        %v1891 = vpack.c.b16 %v1789, %v1787
        %v1892 = vpack.c.b16 %v1790, %v1788
        %v1893 = vpack.c.b16 %v1793, %v1791
        %v1894 = vpack.c.b16 %v1794, %v1792
        %v1895 = vpack.c.b16 %v1797, %v1795
        %v1896 = vpack.c.b16 %v1798, %v1796
        %v1897 = vpack.c.b16 %v1801, %v1799
        %v1898 = vpack.c.b16 %v1802, %v1800
        %v1899 = vpack.c.b16 %v1805, %v1803
        %v1900 = vpack.c.b16 %v1806, %v1804
        %v1901 = vpack.c.b16 %v1809, %v1807
        %v1902 = vpack.c.b16 %v1810, %v1808
        %v1903 = vpack.c.b16 %v1813, %v1811
        %v1904 = vpack.c.b16 %v1814, %v1812
        %v1905 = vpack.c.b16 %v1817, %v1815
        %v1906 = vpack.c.b16 %v1818, %v1816
        %v1907 = vpack.c.b16 %v1821, %v1819
        %v1908 = vpack.c.b16 %v1822, %v1820
        %v1909 = vpack.c.b16 %v1825, %v1823
        %v1910 = vpack.c.b16 %v1826, %v1824
        %v1911 = vpack.c.b16 %v1829, %v1827
        %v1912 = vpack.c.b16 %v1830, %v1828
        %v1913 = vpack.c.b16 %v1833, %v1831
        %v1914 = vpack.c.b16 %v1834, %v1832
        %1995 = vmatprep.subr.bf16.mxu0 %v1836
        %1996 = vmatpush1.bf16.msra.mxu0 %v1835
        %1997 = vmatprep.subr.bf16.mxu0 %v1838
        %1998 = vmatpush1.bf16.msra.mxu0 %v1837
        %1999 = vmatprep.subr.bf16.mxu0 %v1840
        %2000 = vmatpush1.bf16.msra.mxu0 %v1839
        %2001 = vmatprep.subr.bf16.mxu0 %v1842
        %2002 = vmatpush1.bf16.msra.mxu0 %v1841
        %2003 = vmatprep.subr.bf16.mxu0 %v1844
        %2004 = vmatpush1.bf16.msra.mxu0 %v1843
        %2005 = vmatprep.subr.bf16.mxu0 %v1846
        %2006 = vmatpush1.bf16.msra.mxu0 %v1845
        %2007 = vmatprep.subr.bf16.mxu0 %v1848
        %2008 = vmatpush1.bf16.msra.mxu0 %v1847
        %2009 = vmatprep.subr.bf16.mxu0 %v1850
        %2010 = vmatpush1.bf16.msra.mxu0 %v1849
        %2011 = vmatprep.subr.bf16.mxu0 %v1852
        %2012 = vmatpush1.bf16.msra.mxu0 %v1851
        %2013 = vmatprep.subr.bf16.mxu0 %v1854
        %2014 = vmatpush1.bf16.msra.mxu0 %v1853
        %2015 = vmatprep.subr.bf16.mxu0 %v1856
        %2016 = vmatpush1.bf16.msra.mxu0 %v1855
        %2017 = vmatprep.subr.bf16.mxu0 %v1858
        %2018 = vmatpush1.bf16.msra.mxu0 %v1857
        %2019 = vmatprep.subr.bf16.mxu0 %v1860
        %2020 = vmatpush1.bf16.msra.mxu0 %v1859
        %2021 = vmatprep.subr.bf16.mxu0 %v1862
        %2022 = vmatpush1.bf16.msra.mxu0 %v1861
        %2023 = vmatprep.subr.bf16.mxu0 %v1864
        %2024 = vmatpush1.bf16.msra.mxu0 %v1863
        %2025 = vmatprep.subr.bf16.mxu0 %v1866
        %2026 = vmatpush1.bf16.msra.mxu0 %v1865
        %2027 = vmatprep.mubr.bf16.mxu0 %v1499
        %2028 = vmatmul.mubr.bf16.gmra.mrb[0].mxu0 %v1498
        %v2029 = vpop.f32.mrb[0].mxu0
        %v2030 = vadd.f32 %v1588, %v2029
        %v2031 = vpop.f32.mrb[0].mxu0
        %v2032 = vadd.f32 %v1592, %v2031
        %v2033 = vpop.f32.mrb[0].mxu0
        %v2034 = vadd.f32 %v1588, %v2033
        %v2035 = vpop.f32.mrb[0].mxu0
        %v2036 = vadd.f32 %v1592, %v2035
        %2037 = vdwg.mxu0
        %2038 = vmatprep.subr.bf16.mxu0 %v1868
        %2039 = vmatpush1.bf16.msra.mxu0 %v1867
        %2040 = vmatprep.subr.bf16.mxu0 %v1870
        %2041 = vmatpush1.bf16.msra.mxu0 %v1869
        %2042 = vmatprep.subr.bf16.mxu0 %v1872
        %2043 = vmatpush1.bf16.msra.mxu0 %v1871
        %2044 = vmatprep.subr.bf16.mxu0 %v1874
        %2045 = vmatpush1.bf16.msra.mxu0 %v1873
        %2046 = vmatprep.subr.bf16.mxu0 %v1876
        %2047 = vmatpush1.bf16.msra.mxu0 %v1875
        %2048 = vmatprep.subr.bf16.mxu0 %v1878
        %2049 = vmatpush1.bf16.msra.mxu0 %v1877
        %2050 = vmatprep.subr.bf16.mxu0 %v1880
        %2051 = vmatpush1.bf16.msra.mxu0 %v1879
        %2052 = vmatprep.subr.bf16.mxu0 %v1882
        %2053 = vmatpush1.bf16.msra.mxu0 %v1881
        %2054 = vmatprep.subr.bf16.mxu0 %v1884
        %2055 = vmatpush1.bf16.msra.mxu0 %v1883
        %2056 = vmatprep.subr.bf16.mxu0 %v1886
        %2057 = vmatpush1.bf16.msra.mxu0 %v1885
        %2058 = vmatprep.subr.bf16.mxu0 %v1888
        %2059 = vmatpush1.bf16.msra.mxu0 %v1887
        %2060 = vmatprep.subr.bf16.mxu0 %v1890
        %2061 = vmatpush1.bf16.msra.mxu0 %v1889
        %2062 = vmatprep.subr.bf16.mxu0 %v1892
        %2063 = vmatpush1.bf16.msra.mxu0 %v1891
        %2064 = vmatprep.subr.bf16.mxu0 %v1894
        %2065 = vmatpush1.bf16.msra.mxu0 %v1893
        %2066 = vmatprep.subr.bf16.mxu0 %v1896
        %2067 = vmatpush1.bf16.msra.mxu0 %v1895
        %2068 = vmatprep.subr.bf16.mxu0 %v1898
        %2069 = vmatpush1.bf16.msra.mxu0 %v1897
        %2070 = vmatprep.mubr.bf16.mxu0 %v1501
        %2071 = vmatmul.mubr.bf16.gmra.mrb[0].mxu0 %v1500
        %v2072 = vpop.f32.mrb[0].mxu0
        %v2073 = vadd.f32 %v2030, %v2072
        %v2074 = vpop.f32.mrb[0].mxu0
        %v2075 = vadd.f32 %v2032, %v2074
        %v2076 = vpop.f32.mrb[0].mxu0
        %v2077 = vadd.f32 %v2034, %v2076
        %v2078 = vpop.f32.mrb[0].mxu0
        %v2079 = vadd.f32 %v2036, %v2078
        %2080 = vdwg.mxu0
        %2081 = vmatprep.subr.bf16.mxu0 %v1900
        %2082 = vmatpush1.bf16.msra.mxu0 %v1899
        %2083 = vmatprep.subr.bf16.mxu0 %v1902
        %2084 = vmatpush1.bf16.msra.mxu0 %v1901
        %2085 = vmatprep.subr.bf16.mxu0 %v1904
        %2086 = vmatpush1.bf16.msra.mxu0 %v1903
        %2087 = vmatprep.subr.bf16.mxu0 %v1906
        %2088 = vmatpush1.bf16.msra.mxu0 %v1905
        %2089 = vmatprep.subr.bf16.mxu0 %v1908
        %2090 = vmatpush1.bf16.msra.mxu0 %v1907
        %2091 = vmatprep.subr.bf16.mxu0 %v1910
        %2092 = vmatpush1.bf16.msra.mxu0 %v1909
        %2093 = vmatprep.subr.bf16.mxu0 %v1912
        %2094 = vmatpush1.bf16.msra.mxu0 %v1911
        %2095 = vmatprep.subr.bf16.mxu0 %v1914
        %2096 = vmatpush1.bf16.msra.mxu0 %v1913
        %2097 = vmatprep.subr.bf16.mxu0 0
        %2098 = vmatpush1.bf16.msra.mxu0 0
        %2099 = vmatprep.subr.bf16.mxu0 0
        %2100 = vmatpush1.bf16.msra.mxu0 0
        %2101 = vmatprep.subr.bf16.mxu0 0
        %2102 = vmatpush1.bf16.msra.mxu0 0
        %2103 = vmatprep.subr.bf16.mxu0 0
        %2104 = vmatpush1.bf16.msra.mxu0 0
        %2105 = vmatprep.subr.bf16.mxu0 0
        %2106 = vmatpush1.bf16.msra.mxu0 0
        %2107 = vmatprep.subr.bf16.mxu0 0
        %2108 = vmatpush1.bf16.msra.mxu0 0
        %2109 = vmatprep.subr.bf16.mxu0 0
        %2110 = vmatpush1.bf16.msra.mxu0 0
        %2111 = vmatprep.subr.bf16.mxu0 0
        %2112 = vmatpush1.bf16.msra.mxu0 0
        %2113 = vmatprep.mubr.bf16.mxu0 0
        %2114 = vmatmul.mubr.bf16.gmra.mrb[0].mxu0 %v1502
        %v2115 = vpop.f32.mrb[0].mxu0
        %v2116 = vadd.f32 %v2073, %v2115
        %v2117 = vpop.f32.mrb[0].mxu0
        %v2118 = vadd.f32 %v2075, %v2117
        %v2119 = vpop.f32.mrb[0].mxu0
        %v2120 = vadd.f32 %v2077, %v2119
        %v2121 = vpop.f32.mrb[0].mxu0
        %v2122 = vadd.f32 %v2079, %v2121
        %2123 = vdwg.mxu0
        %v2124 = vmax.f32 %v2116, 0.0
        %v2125 = vmax.f32 %v2118, 0.0
        %v2126 = vmax.f32 %v2120, 0.0
        %v2127 = vmax.f32 %v2122, 0.0
        %v2128 = vpack.c.bf16 %v2126, %v2124
        %v2129 = vpack.c.bf16 %v2127, %v2125
        %v2130 = vld [vmem:[%s6] sm:$0xf]
        %v2131 = vld [vmem:[%s6 + $0x4] sm:$0xf]
        %v2132 = vld [vmem:[%s6 + $0x8] sm:$0xf]
        %v2133 = vld [vmem:[%s6 + $0xc] sm:$0xf]
        %v2134 = vld [vmem:[%s6 + $0x10] sm:$0xf]
        %v2135 = vld [vmem:[%s6 + $0x14] sm:$0xf]
        %v2136 = vld [vmem:[%s6 + $0x18] sm:$0xf]
        %v2137 = vld [vmem:[%s6 + $0x1c] sm:$0xf]
        %v2138 = vld [vmem:[%s6 + $0x20] sm:$0xf]
        %v2139 = vld [vmem:[%s6 + $0x24] sm:$0xf]
        %v2140 = vld [vmem:[%s6 + $0x28] sm:$0xf]
        %v2141 = vld [vmem:[%s6 + $0x2c] sm:$0xf]
        %v2142 = vld [vmem:[%s6 + $0x30] sm:$0xf]
        %v2143 = vld [vmem:[%s6 + $0x34] sm:$0xf]
        %v2144 = vld [vmem:[%s6 + $0x38] sm:$0xf]
        %v2145 = vld [vmem:[%s6 + $0x3c] sm:$0xf]
        %v2146 = vld [vmem:[%s6 + $0x40] sm:$0xf]
        %v2147 = vld [vmem:[%s6 + $0x44] sm:$0xf]
        %v2148 = vld [vmem:[%s6 + $0x48] sm:$0xf]
        %v2149 = vld [vmem:[%s6 + $0x4c] sm:$0xf]
        %v2170 = vunpack.c.l.b16 %v2130
        %v2171 = vunpack.c.l.b16 %v2131
        %v2172 = vunpack.c.l.b16 %v2132
        %v2173 = vunpack.c.l.b16 %v2133
        %v2174 = vunpack.c.l.b16 %v2134
        %v2175 = vunpack.c.l.b16 %v2135
        %v2176 = vunpack.c.l.b16 %v2136
        %v2177 = vunpack.c.l.b16 %v2137
        %v2178 = vunpack.c.l.b16 %v2138
        %v2179 = vunpack.c.l.b16 %v2139
        %v2180 = vunpack.c.l.b16 %v2140
        %v2181 = vunpack.c.l.b16 %v2141
        %v2182 = vunpack.c.l.b16 %v2142
        %v2183 = vunpack.c.l.b16 %v2143
        %v2184 = vunpack.c.l.b16 %v2144
        %v2185 = vunpack.c.l.b16 %v2145
        %v2186 = vunpack.c.l.b16 %v2146
        %v2187 = vunpack.c.l.b16 %v2147
        %v2188 = vunpack.c.l.b16 %v2148
        %v2189 = vunpack.c.l.b16 %v2149
        %v2190 = vpack.c.b16 %v2171, %v2170
        %v2191 = vpack.c.b16 %v2173, %v2172
        %v2192 = vpack.c.b16 %v2175, %v2174
        %v2193 = vpack.c.b16 %v2177, %v2176
        %v2194 = vpack.c.b16 %v2179, %v2178
        %v2195 = vpack.c.b16 %v2181, %v2180
        %v2196 = vpack.c.b16 %v2183, %v2182
        %v2197 = vpack.c.b16 %v2185, %v2184
        %v2198 = vpack.c.b16 %v2187, %v2186
        %v2199 = vpack.c.b16 %v2189, %v2188
        %vm2210 = vcmask 261120
        %v2212 = vsel %vm2210, %v2129, 0
        %2214 = vmatprep.subr.bf16.mxu0 0
        %2215 = vmatpush1.bf16.msra.mxu0 %v2190
        %2216 = vmatprep.subr.bf16.mxu0 0
        %2217 = vmatpush1.bf16.msra.mxu0 %v2191
        %2218 = vmatprep.subr.bf16.mxu0 0
        %2219 = vmatpush1.bf16.msra.mxu0 %v2192
        %2220 = vmatprep.subr.bf16.mxu0 0
        %2221 = vmatpush1.bf16.msra.mxu0 %v2193
        %2222 = vmatprep.subr.bf16.mxu0 0
        %2223 = vmatpush1.bf16.msra.mxu0 %v2194
        %2224 = vmatprep.subr.bf16.mxu0 0
        %2225 = vmatpush1.bf16.msra.mxu0 %v2195
        %2226 = vmatprep.subr.bf16.mxu0 0
        %2227 = vmatpush1.bf16.msra.mxu0 %v2196
        %2228 = vmatprep.subr.bf16.mxu0 0
        %2229 = vmatpush1.bf16.msra.mxu0 %v2197
        %2230 = vmatprep.subr.bf16.mxu0 0
        %2231 = vmatpush1.bf16.msra.mxu0 %v2198
        %2232 = vmatprep.subr.bf16.mxu0 0
        %2233 = vmatpush1.bf16.msra.mxu0 %v2199
        %2234 = vmatprep.subr.bf16.mxu0 0
        %2235 = vmatpush1.bf16.msra.mxu0 0
        %2236 = vmatprep.subr.bf16.mxu0 0
        %2237 = vmatpush1.bf16.msra.mxu0 0
        %2238 = vmatprep.subr.bf16.mxu0 0
        %2239 = vmatpush1.bf16.msra.mxu0 0
        %2240 = vmatprep.subr.bf16.mxu0 0
        %2241 = vmatpush1.bf16.msra.mxu0 0
        %2242 = vmatprep.subr.bf16.mxu0 0
        %2243 = vmatpush1.bf16.msra.mxu0 0
        %2244 = vmatprep.subr.bf16.mxu0 0
        %2245 = vmatpush1.bf16.msra.mxu0 0
        %2246 = vmatprep.mubr.bf16.mxu0 %v2212
        %2247 = vmatmul.mubr.bf16.gmra.mrb[0].mxu0 %v2128
        %v2248 = vpop.f32.mrb[0].mxu0
        %v2249 = vadd.f32 0.0, %v2248
        %v2250 = vpop.f32.mrb[0].mxu0
        %v2251 = vpop.f32.mrb[0].mxu0
        %v2252 = vadd.f32 0.0, %v2251
        %v2253 = vpop.f32.mrb[0].mxu0
        %2254 = vdwg.mxu0
        %s2255 = scalar_lea.vmem %s6, 80
        %v2256 = vld [vmem:[%s2255] sm:$0xf]
        %v2257 = vld [vmem:[%s2255 + $0x4] sm:$0xf]
        %v2258 = vld [vmem:[%s2255 + $0x8] sm:$0xf]
        %v2259 = vld [vmem:[%s2255 + $0xc] sm:$0xf]
        %v2260 = vld [vmem:[%s2255 + $0x10] sm:$0xf]
        %v2261 = vld [vmem:[%s2255 + $0x14] sm:$0xf]
        %v2262 = vld [vmem:[%s2255 + $0x18] sm:$0xf]
        %v2263 = vld [vmem:[%s2255 + $0x1c] sm:$0xf]
        %v2264 = vld [vmem:[%s2255 + $0x20] sm:$0xf]
        %v2265 = vld [vmem:[%s2255 + $0x24] sm:$0xf]
        %v2266 = vld [vmem:[%s2255 + $0x28] sm:$0xf]
        %v2267 = vld [vmem:[%s2255 + $0x2c] sm:$0xf]
        %v2268 = vld [vmem:[%s2255 + $0x30] sm:$0xf]
        %v2269 = vld [vmem:[%s2255 + $0x34] sm:$0xf]
        %v2270 = vld [vmem:[%s2255 + $0x38] sm:$0xf]
        %v2271 = vld [vmem:[%s2255 + $0x3c] sm:$0xf]
        %v2272 = vld [vmem:[%s2255 + $0x40] sm:$0xf]
        %v2273 = vld [vmem:[%s2255 + $0x44] sm:$0xf]
        %v2274 = vld [vmem:[%s2255 + $0x48] sm:$0xf]
        %v2275 = vld [vmem:[%s2255 + $0x4c] sm:$0xf]
        %v2296 = vunpack.c.l.b16 %v2256
        %v2297 = vunpack.c.l.b16 %v2257
        %v2298 = vunpack.c.l.b16 %v2258
        %v2299 = vunpack.c.l.b16 %v2259
        %v2300 = vunpack.c.l.b16 %v2260
        %v2301 = vunpack.c.l.b16 %v2261
        %v2302 = vunpack.c.l.b16 %v2262
        %v2303 = vunpack.c.l.b16 %v2263
        %v2304 = vunpack.c.l.b16 %v2264
        %v2305 = vunpack.c.l.b16 %v2265
        %v2306 = vunpack.c.l.b16 %v2266
        %v2307 = vunpack.c.l.b16 %v2267
        %v2308 = vunpack.c.l.b16 %v2268
        %v2309 = vunpack.c.l.b16 %v2269
        %v2310 = vunpack.c.l.b16 %v2270
        %v2311 = vunpack.c.l.b16 %v2271
        %v2312 = vunpack.c.l.b16 %v2272
        %v2313 = vunpack.c.l.b16 %v2273
        %v2314 = vunpack.c.l.b16 %v2274
        %v2315 = vunpack.c.l.b16 %v2275
        %v2316 = vpack.c.b16 %v2297, %v2296
        %v2317 = vpack.c.b16 %v2299, %v2298
        %v2318 = vpack.c.b16 %v2301, %v2300
        %v2319 = vpack.c.b16 %v2303, %v2302
        %v2320 = vpack.c.b16 %v2305, %v2304
        %v2321 = vpack.c.b16 %v2307, %v2306
        %v2322 = vpack.c.b16 %v2309, %v2308
        %v2323 = vpack.c.b16 %v2311, %v2310
        %v2324 = vpack.c.b16 %v2313, %v2312
        %v2325 = vpack.c.b16 %v2315, %v2314
        %2336 = vmatprep.subr.bf16.mxu0 0
        %2337 = vmatpush1.bf16.msra.mxu0 %v2316
        %2338 = vmatprep.subr.bf16.mxu0 0
        %2339 = vmatpush1.bf16.msra.mxu0 %v2317
        %2340 = vmatprep.subr.bf16.mxu0 0
        %2341 = vmatpush1.bf16.msra.mxu0 %v2318
        %2342 = vmatprep.subr.bf16.mxu0 0
        %2343 = vmatpush1.bf16.msra.mxu0 %v2319
        %2344 = vmatprep.subr.bf16.mxu0 0
        %2345 = vmatpush1.bf16.msra.mxu0 %v2320
        %2346 = vmatprep.subr.bf16.mxu0 0
        %2347 = vmatpush1.bf16.msra.mxu0 %v2321
        %2348 = vmatprep.subr.bf16.mxu0 0
        %2349 = vmatpush1.bf16.msra.mxu0 %v2322
        %2350 = vmatprep.subr.bf16.mxu0 0
        %2351 = vmatpush1.bf16.msra.mxu0 %v2323
        %2352 = vmatprep.subr.bf16.mxu0 0
        %2353 = vmatpush1.bf16.msra.mxu0 %v2324
        %2354 = vmatprep.subr.bf16.mxu0 0
        %2355 = vmatpush1.bf16.msra.mxu0 %v2325
        %2356 = vmatprep.subr.bf16.mxu0 0
        %2357 = vmatpush1.bf16.msra.mxu0 0
        %2358 = vmatprep.subr.bf16.mxu0 0
        %2359 = vmatpush1.bf16.msra.mxu0 0
        %2360 = vmatprep.subr.bf16.mxu0 0
        %2361 = vmatpush1.bf16.msra.mxu0 0
        %2362 = vmatprep.subr.bf16.mxu0 0
        %2363 = vmatpush1.bf16.msra.mxu0 0
        %2364 = vmatprep.subr.bf16.mxu0 0
        %2365 = vmatpush1.bf16.msra.mxu0 0
        %2366 = vmatprep.subr.bf16.mxu0 0
        %2367 = vmatpush1.bf16.msra.mxu0 0
        %2368 = vmatprep.mubr.bf16.mxu0 %v2212
        %2369 = vmatmul.mubr.bf16.gmra.mrb[0].mxu0 %v2128
        %v2370 = vpop.f32.mrb[0].mxu0
        %v2371 = vadd.f32 0.0, %v2370
        %v2372 = vpop.f32.mrb[0].mxu0
        %v2373 = vpop.f32.mrb[0].mxu0
        %v2374 = vadd.f32 0.0, %v2373
        %v2375 = vpop.f32.mrb[0].mxu0
        %2376 = vdwg.mxu0
        %v2377 = vmax.f32 %v2249, %v2371
        %v2378 = vmax.f32 %v2252, %v2374
        %2379 = vst [vmem:[#allocation4] sm:$0xff] %v2377
        %2380 = vst [vmem:[#allocation4 + $0x8] sm:$0xf] %v2378
        %v2381 = vld [vmem:[#allocation4] ss:$16 sm:$0x1]
        %s2382 = scalar_lea.vmem [#allocation4], 1
        %v2383 = vld [vmem:[%s2382] ss:$16 sm:$0x1]
        %v2384 = vmax.f32 %v2381, %v2383
        %s2385 = scalar_lea.vmem [#allocation4], 2
        %v2386 = vld [vmem:[%s2385] ss:$16 sm:$0x1]
        %s2387 = scalar_lea.vmem [#allocation4], 3
        %v2388 = vld [vmem:[%s2387] ss:$16 sm:$0x1]
        %v2389 = vmax.f32 %v2386, %v2388
        %s2390 = scalar_lea.vmem [#allocation4], 4
        %v2391 = vld [vmem:[%s2390] ss:$16 sm:$0x1]
        %s2392 = scalar_lea.vmem [#allocation4], 5
        %v2393 = vld [vmem:[%s2392] ss:$16 sm:$0x1]
        %v2394 = vmax.f32 %v2391, %v2393
        %s2395 = scalar_lea.vmem [#allocation4], 6
        %v2396 = vld [vmem:[%s2395] ss:$16 sm:$0x1]
        %s2397 = scalar_lea.vmem [#allocation4], 7
        %v2398 = vld [vmem:[%s2397] ss:$16 sm:$0x1]
        %v2399 = vmax.f32 %v2396, %v2398
        %s2400 = scalar_lea.vmem [#allocation4], 8
        %v2401 = vld [vmem:[%s2400] ss:$16 sm:$0x1]
        %s2402 = scalar_lea.vmem [#allocation4], 9
        %v2403 = vld [vmem:[%s2402] ss:$16 sm:$0x1]
        %v2404 = vmax.f32 %v2401, %v2403
        %v2405 = vpack.c.bf16 %v2384, %v2384
        %v2406 = vpack.c.bf16 %v2389, %v2389
        %v2407 = vpack.c.bf16 %v2394, %v2394
        %v2408 = vpack.c.bf16 %v2399, %v2399
        %v2409 = vpack.c.bf16 %v2404, %v2404
        %v2410 = vld [vmem:[%s7] sm:$0xf]
        %v2411 = vld [vmem:[%s7 + $0x4] sm:$0xf]
        %v2412 = vld [vmem:[%s7 + $0x8] sm:$0xf]
        %v2413 = vld [vmem:[%s7 + $0xc] sm:$0xf]
        %v2414 = vld [vmem:[%s7 + $0x10] sm:$0xf]
        %v2415 = vld [vmem:[%s7 + $0x14] sm:$0xf]
        %v2416 = vld [vmem:[%s7 + $0x18] sm:$0xf]
        %v2417 = vld [vmem:[%s7 + $0x1c] sm:$0xf]
        %v2418 = vld [vmem:[%s7 + $0x20] sm:$0xf]
        %v2419 = vld [vmem:[%s7 + $0x24] sm:$0xf]
        %v2420 = vld [vmem:[%s7 + $0x28] sm:$0xf]
        %v2421 = vld [vmem:[%s7 + $0x2c] sm:$0xf]
        %v2422 = vld [vmem:[%s7 + $0x30] sm:$0xf]
        %v2423 = vld [vmem:[%s7 + $0x34] sm:$0xf]
        %v2424 = vld [vmem:[%s7 + $0x38] sm:$0xf]
        %v2425 = vld [vmem:[%s7 + $0x3c] sm:$0xf]
        %v2426 = vld [vmem:[%s7 + $0x40] sm:$0xf]
        %v2427 = vld [vmem:[%s7 + $0x44] sm:$0xf]
        %v2428 = vld [vmem:[%s7 + $0x48] sm:$0xf]
        %v2429 = vld [vmem:[%s7 + $0x4c] sm:$0xf]
        %v2430 = vld [vmem:[%s7 + $0x50] sm:$0xf]
        %v2431 = vld [vmem:[%s7 + $0x54] sm:$0xf]
        %v2432 = vld [vmem:[%s7 + $0x58] sm:$0xf]
        %v2433 = vld [vmem:[%s7 + $0x5c] sm:$0xf]
        %v2434 = vld [vmem:[%s7 + $0x60] sm:$0xf]
        %v2435 = vld [vmem:[%s7 + $0x64] sm:$0xf]
        %v2436 = vld [vmem:[%s7 + $0x68] sm:$0xf]
        %v2437 = vld [vmem:[%s7 + $0x6c] sm:$0xf]
        %v2438 = vld [vmem:[%s7 + $0x70] sm:$0xf]
        %v2439 = vld [vmem:[%s7 + $0x74] sm:$0xf]
        %v2440 = vld [vmem:[%s7 + $0x78] sm:$0xf]
        %v2441 = vld [vmem:[%s7 + $0x7c] sm:$0xf]
        %v2442 = vld [vmem:[%s7 + $0x80] sm:$0xf]
        %v2443 = vld [vmem:[%s7 + $0x84] sm:$0xf]
        %v2444 = vld [vmem:[%s7 + $0x88] sm:$0xf]
        %v2445 = vld [vmem:[%s7 + $0x8c] sm:$0xf]
        %v2446 = vld [vmem:[%s7 + $0x90] sm:$0xf]
        %v2447 = vld [vmem:[%s7 + $0x94] sm:$0xf]
        %v2448 = vld [vmem:[%s7 + $0x98] sm:$0xf]
        %v2449 = vld [vmem:[%s7 + $0x9c] sm:$0xf]
        %v2450 = vld [vmem:[%s7 + $0xa0] sm:$0xf]
        %v2451 = vld [vmem:[%s7 + $0xa4] sm:$0xf]
        %v2452 = vld [vmem:[%s7 + $0xa8] sm:$0xf]
        %v2453 = vld [vmem:[%s7 + $0xac] sm:$0xf]
        %v2454 = vld [vmem:[%s7 + $0xb0] sm:$0xf]
        %v2455 = vld [vmem:[%s7 + $0xb4] sm:$0xf]
        %v2456 = vld [vmem:[%s7 + $0xb8] sm:$0xf]
        %v2457 = vld [vmem:[%s7 + $0xbc] sm:$0xf]
        %v2458 = vld [vmem:[%s7 + $0xc0] sm:$0xf]
        %v2459 = vld [vmem:[%s7 + $0xc4] sm:$0xf]
        %v2460 = vld [vmem:[%s7 + $0xc8] sm:$0xf]
        %v2461 = vld [vmem:[%s7 + $0xcc] sm:$0xf]
        %v2462 = vld [vmem:[%s7 + $0xd0] sm:$0xf]
        %v2463 = vld [vmem:[%s7 + $0xd4] sm:$0xf]
        %v2464 = vld [vmem:[%s7 + $0xd8] sm:$0xf]
        %v2465 = vld [vmem:[%s7 + $0xdc] sm:$0xf]
        %v2466 = vld [vmem:[%s7 + $0xe0] sm:$0xf]
        %v2467 = vld [vmem:[%s7 + $0xe4] sm:$0xf]
        %v2468 = vld [vmem:[%s7 + $0xe8] sm:$0xf]
        %v2469 = vld [vmem:[%s7 + $0xec] sm:$0xf]
        %v2470 = vld [vmem:[%s7 + $0xf0] sm:$0xf]
        %v2471 = vld [vmem:[%s7 + $0xf4] sm:$0xf]
        %v2472 = vld [vmem:[%s7 + $0xf8] sm:$0xf]
        %v2473 = vld [vmem:[%s7 + $0xfc] sm:$0xf]
        %v2474 = vld [vmem:[%s7 + $0x100] sm:$0xf]
        %v2475 = vld [vmem:[%s7 + $0x104] sm:$0xf]
        %v2476 = vld [vmem:[%s7 + $0x108] sm:$0xf]
        %v2477 = vld [vmem:[%s7 + $0x10c] sm:$0xf]
        %v2478 = vld [vmem:[%s7 + $0x110] sm:$0xf]
        %v2479 = vld [vmem:[%s7 + $0x114] sm:$0xf]
        %v2480 = vld [vmem:[%s7 + $0x118] sm:$0xf]
        %v2481 = vld [vmem:[%s7 + $0x11c] sm:$0xf]
        %v2482 = vld [vmem:[%s7 + $0x120] sm:$0xf]
        %v2483 = vld [vmem:[%s7 + $0x124] sm:$0xf]
        %v2484 = vld [vmem:[%s7 + $0x128] sm:$0xf]
        %v2485 = vld [vmem:[%s7 + $0x12c] sm:$0xf]
        %v2486 = vld [vmem:[%s7 + $0x130] sm:$0xf]
        %v2487 = vld [vmem:[%s7 + $0x134] sm:$0xf]
        %v2488 = vld [vmem:[%s7 + $0x138] sm:$0xf]
        %v2489 = vld [vmem:[%s7 + $0x13c] sm:$0xf]
        %v2490 = vld [vmem:[%s8] sm:$0x1]
        %v2571 = vunpack.c.l.b16 %v2410
        %v2572 = vunpack.c.l.b16 %v2411
        %v2573 = vunpack.c.l.b16 %v2412
        %v2574 = vunpack.c.l.b16 %v2413
        %v2575 = vunpack.c.l.b16 %v2414
        %v2576 = vunpack.c.l.b16 %v2415
        %v2577 = vunpack.c.l.b16 %v2416
        %v2578 = vunpack.c.l.b16 %v2417
        %v2579 = vunpack.c.l.b16 %v2418
        %v2580 = vunpack.c.l.b16 %v2419
        %v2581 = vunpack.c.l.b16 %v2420
        %v2582 = vunpack.c.l.b16 %v2421
        %v2583 = vunpack.c.l.b16 %v2422
        %v2584 = vunpack.c.l.b16 %v2423
        %v2585 = vunpack.c.l.b16 %v2424
        %v2586 = vunpack.c.l.b16 %v2425
        %v2587 = vunpack.c.l.b16 %v2426
        %v2588 = vunpack.c.l.b16 %v2427
        %v2589 = vunpack.c.l.b16 %v2428
        %v2590 = vunpack.c.l.b16 %v2429
        %v2591 = vunpack.c.l.b16 %v2430
        %v2592 = vunpack.c.l.b16 %v2431
        %v2593 = vunpack.c.l.b16 %v2432
        %v2594 = vunpack.c.l.b16 %v2433
        %v2595 = vunpack.c.l.b16 %v2434
        %v2596 = vunpack.c.l.b16 %v2435
        %v2597 = vunpack.c.l.b16 %v2436
        %v2598 = vunpack.c.l.b16 %v2437
        %v2599 = vunpack.c.l.b16 %v2438
        %v2600 = vunpack.c.l.b16 %v2439
        %v2601 = vunpack.c.l.b16 %v2440
        %v2602 = vunpack.c.l.b16 %v2441
        %v2603 = vunpack.c.l.b16 %v2442
        %v2604 = vunpack.c.l.b16 %v2443
        %v2605 = vunpack.c.l.b16 %v2444
        %v2606 = vunpack.c.l.b16 %v2445
        %v2607 = vunpack.c.l.b16 %v2446
        %v2608 = vunpack.c.l.b16 %v2447
        %v2609 = vunpack.c.l.b16 %v2448
        %v2610 = vunpack.c.l.b16 %v2449
        %v2611 = vunpack.c.l.b16 %v2450
        %v2612 = vunpack.c.l.b16 %v2451
        %v2613 = vunpack.c.l.b16 %v2452
        %v2614 = vunpack.c.l.b16 %v2453
        %v2615 = vunpack.c.l.b16 %v2454
        %v2616 = vunpack.c.l.b16 %v2455
        %v2617 = vunpack.c.l.b16 %v2456
        %v2618 = vunpack.c.l.b16 %v2457
        %v2619 = vunpack.c.l.b16 %v2458
        %v2620 = vunpack.c.l.b16 %v2459
        %v2621 = vunpack.c.l.b16 %v2460
        %v2622 = vunpack.c.l.b16 %v2461
        %v2623 = vunpack.c.l.b16 %v2462
        %v2624 = vunpack.c.l.b16 %v2463
        %v2625 = vunpack.c.l.b16 %v2464
        %v2626 = vunpack.c.l.b16 %v2465
        %v2627 = vunpack.c.l.b16 %v2466
        %v2628 = vunpack.c.l.b16 %v2467
        %v2629 = vunpack.c.l.b16 %v2468
        %v2630 = vunpack.c.l.b16 %v2469
        %v2631 = vunpack.c.l.b16 %v2470
        %v2632 = vunpack.c.l.b16 %v2471
        %v2633 = vunpack.c.l.b16 %v2472
        %v2634 = vunpack.c.l.b16 %v2473
        %v2635 = vunpack.c.l.b16 %v2474
        %v2636 = vunpack.c.l.b16 %v2475
        %v2637 = vunpack.c.l.b16 %v2476
        %v2638 = vunpack.c.l.b16 %v2477
        %v2639 = vunpack.c.l.b16 %v2478
        %v2640 = vunpack.c.l.b16 %v2479
        %v2641 = vunpack.c.l.b16 %v2480
        %v2642 = vunpack.c.l.b16 %v2481
        %v2643 = vunpack.c.l.b16 %v2482
        %v2644 = vunpack.c.l.b16 %v2483
        %v2645 = vunpack.c.l.b16 %v2484
        %v2646 = vunpack.c.l.b16 %v2485
        %v2647 = vunpack.c.l.b16 %v2486
        %v2648 = vunpack.c.l.b16 %v2487
        %v2649 = vunpack.c.l.b16 %v2488
        %v2650 = vunpack.c.l.b16 %v2489
        %v2651 = vpack.c.b16 %v2572, %v2571
        %v2652 = vpack.c.b16 %v2574, %v2573
        %v2653 = vpack.c.b16 %v2576, %v2575
        %v2654 = vpack.c.b16 %v2578, %v2577
        %v2655 = vpack.c.b16 %v2580, %v2579
        %v2656 = vpack.c.b16 %v2582, %v2581
        %v2657 = vpack.c.b16 %v2584, %v2583
        %v2658 = vpack.c.b16 %v2586, %v2585
        %v2659 = vpack.c.b16 %v2588, %v2587
        %v2660 = vpack.c.b16 %v2590, %v2589
        %v2661 = vpack.c.b16 %v2592, %v2591
        %v2662 = vpack.c.b16 %v2594, %v2593
        %v2663 = vpack.c.b16 %v2596, %v2595
        %v2664 = vpack.c.b16 %v2598, %v2597
        %v2665 = vpack.c.b16 %v2600, %v2599
        %v2666 = vpack.c.b16 %v2602, %v2601
        %v2667 = vpack.c.b16 %v2604, %v2603
        %v2668 = vpack.c.b16 %v2606, %v2605
        %v2669 = vpack.c.b16 %v2608, %v2607
        %v2670 = vpack.c.b16 %v2610, %v2609
        %v2671 = vpack.c.b16 %v2612, %v2611
        %v2672 = vpack.c.b16 %v2614, %v2613
        %v2673 = vpack.c.b16 %v2616, %v2615
        %v2674 = vpack.c.b16 %v2618, %v2617
        %v2675 = vpack.c.b16 %v2620, %v2619
        %v2676 = vpack.c.b16 %v2622, %v2621
        %v2677 = vpack.c.b16 %v2624, %v2623
        %v2678 = vpack.c.b16 %v2626, %v2625
        %v2679 = vpack.c.b16 %v2628, %v2627
        %v2680 = vpack.c.b16 %v2630, %v2629
        %v2681 = vpack.c.b16 %v2632, %v2631
        %v2682 = vpack.c.b16 %v2634, %v2633
        %v2683 = vpack.c.b16 %v2636, %v2635
        %v2684 = vpack.c.b16 %v2638, %v2637
        %v2685 = vpack.c.b16 %v2640, %v2639
        %v2686 = vpack.c.b16 %v2642, %v2641
        %v2687 = vpack.c.b16 %v2644, %v2643
        %v2688 = vpack.c.b16 %v2646, %v2645
        %v2689 = vpack.c.b16 %v2648, %v2647
        %v2690 = vpack.c.b16 %v2650, %v2649
        %2731 = vmatprep.subr.bf16.mxu0 0
        %2732 = vmatpush1.bf16.msra.mxu0 %v2651
        %2733 = vmatprep.subr.bf16.mxu0 0
        %2734 = vmatpush1.bf16.msra.mxu0 %v2652
        %2735 = vmatprep.subr.bf16.mxu0 0
        %2736 = vmatpush1.bf16.msra.mxu0 %v2653
        %2737 = vmatprep.subr.bf16.mxu0 0
        %2738 = vmatpush1.bf16.msra.mxu0 %v2654
        %2739 = vmatprep.subr.bf16.mxu0 0
        %2740 = vmatpush1.bf16.msra.mxu0 %v2655
        %2741 = vmatprep.subr.bf16.mxu0 0
        %2742 = vmatpush1.bf16.msra.mxu0 %v2656
        %2743 = vmatprep.subr.bf16.mxu0 0
        %2744 = vmatpush1.bf16.msra.mxu0 %v2657
        %2745 = vmatprep.subr.bf16.mxu0 0
        %2746 = vmatpush1.bf16.msra.mxu0 %v2658
        %2747 = vmatprep.subr.bf16.mxu0 0
        %2748 = vmatpush1.bf16.msra.mxu0 %v2659
        %2749 = vmatprep.subr.bf16.mxu0 0
        %2750 = vmatpush1.bf16.msra.mxu0 %v2660
        %2751 = vmatprep.subr.bf16.mxu0 0
        %2752 = vmatpush1.bf16.msra.mxu0 %v2661
        %2753 = vmatprep.subr.bf16.mxu0 0
        %2754 = vmatpush1.bf16.msra.mxu0 %v2662
        %2755 = vmatprep.subr.bf16.mxu0 0
        %2756 = vmatpush1.bf16.msra.mxu0 %v2663
        %2757 = vmatprep.subr.bf16.mxu0 0
        %2758 = vmatpush1.bf16.msra.mxu0 %v2664
        %2759 = vmatprep.subr.bf16.mxu0 0
        %2760 = vmatpush1.bf16.msra.mxu0 %v2665
        %2761 = vmatprep.subr.bf16.mxu0 0
        %2762 = vmatpush1.bf16.msra.mxu0 %v2666
        %2763 = vmatprep.mubr.bf16.mxu0 %v2406
        %2764 = vmatmul.mubr.bf16.gmra.mrb[0].mxu0 %v2405
        %v2765 = vpop.f32.mrb[0].mxu0
        %v2766 = vadd.f32 %v2490, %v2765
        %v2767 = vpop.f32.mrb[0].mxu0
        %v2768 = vpop.f32.mrb[0].mxu0
        %v2769 = vpop.f32.mrb[0].mxu0
        %2770 = vdwg.mxu0
        %2771 = vmatprep.subr.bf16.mxu0 0
        %2772 = vmatpush1.bf16.msra.mxu0 %v2667
        %2773 = vmatprep.subr.bf16.mxu0 0
        %2774 = vmatpush1.bf16.msra.mxu0 %v2668
        %2775 = vmatprep.subr.bf16.mxu0 0
        %2776 = vmatpush1.bf16.msra.mxu0 %v2669
        %2777 = vmatprep.subr.bf16.mxu0 0
        %2778 = vmatpush1.bf16.msra.mxu0 %v2670
        %2779 = vmatprep.subr.bf16.mxu0 0
        %2780 = vmatpush1.bf16.msra.mxu0 %v2671
        %2781 = vmatprep.subr.bf16.mxu0 0
        %2782 = vmatpush1.bf16.msra.mxu0 %v2672
        %2783 = vmatprep.subr.bf16.mxu0 0
        %2784 = vmatpush1.bf16.msra.mxu0 %v2673
        %2785 = vmatprep.subr.bf16.mxu0 0
        %2786 = vmatpush1.bf16.msra.mxu0 %v2674
        %2787 = vmatprep.subr.bf16.mxu0 0
        %2788 = vmatpush1.bf16.msra.mxu0 %v2675
        %2789 = vmatprep.subr.bf16.mxu0 0
        %2790 = vmatpush1.bf16.msra.mxu0 %v2676
        %2791 = vmatprep.subr.bf16.mxu0 0
        %2792 = vmatpush1.bf16.msra.mxu0 %v2677
        %2793 = vmatprep.subr.bf16.mxu0 0
        %2794 = vmatpush1.bf16.msra.mxu0 %v2678
        %2795 = vmatprep.subr.bf16.mxu0 0
        %2796 = vmatpush1.bf16.msra.mxu0 %v2679
        %2797 = vmatprep.subr.bf16.mxu0 0
        %2798 = vmatpush1.bf16.msra.mxu0 %v2680
        %2799 = vmatprep.subr.bf16.mxu0 0
        %2800 = vmatpush1.bf16.msra.mxu0 %v2681
        %2801 = vmatprep.subr.bf16.mxu0 0
        %2802 = vmatpush1.bf16.msra.mxu0 %v2682
        %2803 = vmatprep.mubr.bf16.mxu0 %v2408
        %2804 = vmatmul.mubr.bf16.gmra.mrb[0].mxu0 %v2407
        %v2805 = vpop.f32.mrb[0].mxu0
        %v2806 = vadd.f32 %v2766, %v2805
        %v2807 = vpop.f32.mrb[0].mxu0
        %v2808 = vpop.f32.mrb[0].mxu0
        %v2809 = vpop.f32.mrb[0].mxu0
        %2810 = vdwg.mxu0
        %2811 = vmatprep.subr.bf16.mxu0 0
        %2812 = vmatpush1.bf16.msra.mxu0 %v2683
        %2813 = vmatprep.subr.bf16.mxu0 0
        %2814 = vmatpush1.bf16.msra.mxu0 %v2684
        %2815 = vmatprep.subr.bf16.mxu0 0
        %2816 = vmatpush1.bf16.msra.mxu0 %v2685
        %2817 = vmatprep.subr.bf16.mxu0 0
        %2818 = vmatpush1.bf16.msra.mxu0 %v2686
        %2819 = vmatprep.subr.bf16.mxu0 0
        %2820 = vmatpush1.bf16.msra.mxu0 %v2687
        %2821 = vmatprep.subr.bf16.mxu0 0
        %2822 = vmatpush1.bf16.msra.mxu0 %v2688
        %2823 = vmatprep.subr.bf16.mxu0 0
        %2824 = vmatpush1.bf16.msra.mxu0 %v2689
        %2825 = vmatprep.subr.bf16.mxu0 0
        %2826 = vmatpush1.bf16.msra.mxu0 %v2690
        %2827 = vmatprep.subr.bf16.mxu0 0
        %2828 = vmatpush1.bf16.msra.mxu0 0
        %2829 = vmatprep.subr.bf16.mxu0 0
        %2830 = vmatpush1.bf16.msra.mxu0 0
        %2831 = vmatprep.subr.bf16.mxu0 0
        %2832 = vmatpush1.bf16.msra.mxu0 0
        %2833 = vmatprep.subr.bf16.mxu0 0
        %2834 = vmatpush1.bf16.msra.mxu0 0
        %2835 = vmatprep.subr.bf16.mxu0 0
        %2836 = vmatpush1.bf16.msra.mxu0 0
        %2837 = vmatprep.subr.bf16.mxu0 0
        %2838 = vmatpush1.bf16.msra.mxu0 0
        %2839 = vmatprep.subr.bf16.mxu0 0
        %2840 = vmatpush1.bf16.msra.mxu0 0
        %2841 = vmatprep.subr.bf16.mxu0 0
        %2842 = vmatpush1.bf16.msra.mxu0 0
        %2843 = vmatprep.mubr.bf16.mxu0 0
        %2844 = vmatmul.mubr.bf16.gmra.mrb[0].mxu0 %v2409
        %v2845 = vpop.f32.mrb[0].mxu0
        %v2846 = vadd.f32 %v2806, %v2845
        %v2847 = vpop.f32.mrb[0].mxu0
        %v2848 = vpop.f32.mrb[0].mxu0
        %v2849 = vpop.f32.mrb[0].mxu0
        %2850 = vdwg.mxu0
        %v2851 = vmax.f32 %v2846, 0.0
        %v2852 = vpack.c.bf16 %v2851, %v2851
        %v2853 = vld [vmem:[%s9] sm:$0xf]
        %v2854 = vld [vmem:[%s9 + $0x4] sm:$0xf]
        %v2855 = vld [vmem:[%s9 + $0x8] sm:$0xf]
        %v2856 = vld [vmem:[%s9 + $0xc] sm:$0xf]
        %v2857 = vld [vmem:[%s9 + $0x10] sm:$0xf]
        %v2858 = vld [vmem:[%s9 + $0x14] sm:$0xf]
        %v2859 = vld [vmem:[%s9 + $0x18] sm:$0xf]
        %v2860 = vld [vmem:[%s9 + $0x1c] sm:$0xf]
        %v2861 = vld [vmem:[%s9 + $0x20] sm:$0xf]
        %v2862 = vld [vmem:[%s9 + $0x24] sm:$0xf]
        %v2863 = vld [vmem:[%s9 + $0x28] sm:$0xf]
        %v2864 = vld [vmem:[%s9 + $0x2c] sm:$0xf]
        %v2865 = vld [vmem:[%s9 + $0x30] sm:$0xf]
        %v2866 = vld [vmem:[%s9 + $0x34] sm:$0xf]
        %v2867 = vld [vmem:[%s9 + $0x38] sm:$0xf]
        %v2868 = vld [vmem:[%s9 + $0x3c] sm:$0xf]
        %v2869 = vld [vmem:[%s10] sm:$0x1]
        %v2886 = vunpack.c.l.b16 %v2853
        %v2887 = vunpack.c.l.b16 %v2854
        %v2888 = vunpack.c.l.b16 %v2855
        %v2889 = vunpack.c.l.b16 %v2856
        %v2890 = vunpack.c.l.b16 %v2857
        %v2891 = vunpack.c.l.b16 %v2858
        %v2892 = vunpack.c.l.b16 %v2859
        %v2893 = vunpack.c.l.b16 %v2860
        %v2894 = vunpack.c.l.b16 %v2861
        %v2895 = vunpack.c.l.b16 %v2862
        %v2896 = vunpack.c.l.b16 %v2863
        %v2897 = vunpack.c.l.b16 %v2864
        %v2898 = vunpack.c.l.b16 %v2865
        %v2899 = vunpack.c.l.b16 %v2866
        %v2900 = vunpack.c.l.b16 %v2867
        %v2901 = vunpack.c.l.b16 %v2868
        %v2902 = vpack.c.b16 %v2887, %v2886
        %v2903 = vpack.c.b16 %v2889, %v2888
        %v2904 = vpack.c.b16 %v2891, %v2890
        %v2905 = vpack.c.b16 %v2893, %v2892
        %v2906 = vpack.c.b16 %v2895, %v2894
        %v2907 = vpack.c.b16 %v2897, %v2896
        %v2908 = vpack.c.b16 %v2899, %v2898
        %v2909 = vpack.c.b16 %v2901, %v2900
        %2918 = vmatprep.subr.bf16.mxu0 0
        %2919 = vmatpush1.bf16.msra.mxu0 %v2902
        %2920 = vmatprep.subr.bf16.mxu0 0
        %2921 = vmatpush1.bf16.msra.mxu0 %v2903
        %2922 = vmatprep.subr.bf16.mxu0 0
        %2923 = vmatpush1.bf16.msra.mxu0 %v2904
        %2924 = vmatprep.subr.bf16.mxu0 0
        %2925 = vmatpush1.bf16.msra.mxu0 %v2905
        %2926 = vmatprep.subr.bf16.mxu0 0
        %2927 = vmatpush1.bf16.msra.mxu0 %v2906
        %2928 = vmatprep.subr.bf16.mxu0 0
        %2929 = vmatpush1.bf16.msra.mxu0 %v2907
        %2930 = vmatprep.subr.bf16.mxu0 0
        %2931 = vmatpush1.bf16.msra.mxu0 %v2908
        %2932 = vmatprep.subr.bf16.mxu0 0
        %2933 = vmatpush1.bf16.msra.mxu0 %v2909
        %2934 = vmatprep.subr.bf16.mxu0 0
        %2935 = vmatpush1.bf16.msra.mxu0 0
        %2936 = vmatprep.subr.bf16.mxu0 0
        %2937 = vmatpush1.bf16.msra.mxu0 0
        %2938 = vmatprep.subr.bf16.mxu0 0
        %2939 = vmatpush1.bf16.msra.mxu0 0
        %2940 = vmatprep.subr.bf16.mxu0 0
        %2941 = vmatpush1.bf16.msra.mxu0 0
        %2942 = vmatprep.subr.bf16.mxu0 0
        %2943 = vmatpush1.bf16.msra.mxu0 0
        %2944 = vmatprep.subr.bf16.mxu0 0
        %2945 = vmatpush1.bf16.msra.mxu0 0
        %2946 = vmatprep.subr.bf16.mxu0 0
        %2947 = vmatpush1.bf16.msra.mxu0 0
        %2948 = vmatprep.subr.bf16.mxu0 0
        %2949 = vmatpush1.bf16.msra.mxu0 0
        %2950 = vmatprep.mubr.bf16.mxu0 0
        %2951 = vmatmul.mubr.bf16.gmra.mrb[0].mxu0 %v2852
        %v2952 = vpop.f32.mrb[0].mxu0
        %v2953 = vadd.f32 %v2869, %v2952
        %v2954 = vpop.f32.mrb[0].mxu0
        %v2955 = vpop.f32.mrb[0].mxu0
        %v2956 = vpop.f32.mrb[0].mxu0
        %2957 = vdwg.mxu0
        %v2958 = vmax.f32 %v2953, 0.0
        %v2959 = vpack.c.bf16 %v2958, %v2958
        %v2960 = vld [vmem:[%s11] sm:$0xf]
        %v2961 = vld [vmem:[%s11 + $0x4] sm:$0xf]
        %v2962 = vld [vmem:[%s11 + $0x8] sm:$0xf]
        %v2963 = vld [vmem:[%s11 + $0xc] sm:$0xf]
        %v2964 = vld [vmem:[%s11 + $0x10] sm:$0xf]
        %v2965 = vld [vmem:[%s11 + $0x14] sm:$0xf]
        %v2966 = vld [vmem:[%s11 + $0x18] sm:$0xf]
        %v2967 = vld [vmem:[%s11 + $0x1c] sm:$0xf]
        %v2968 = vld [vmem:[%s11 + $0x20] sm:$0xf]
        %v2969 = vld [vmem:[%s11 + $0x24] sm:$0xf]
        %v2970 = vld [vmem:[%s11 + $0x28] sm:$0xf]
        %v2971 = vld [vmem:[%s11 + $0x2c] sm:$0xf]
        %v2972 = vld [vmem:[%s11 + $0x30] sm:$0xf]
        %v2973 = vld [vmem:[%s11 + $0x34] sm:$0xf]
        %v2974 = vld [vmem:[%s11 + $0x38] sm:$0xf]
        %v2975 = vld [vmem:[%s11 + $0x3c] sm:$0xf]
        %v2976 = vld [vmem:[%s12] sm:$0x1]
        %v2993 = vunpack.c.l.b16 %v2960
        %v2994 = vunpack.c.l.b16 %v2961
        %v2995 = vunpack.c.l.b16 %v2962
        %v2996 = vunpack.c.l.b16 %v2963
        %v2997 = vunpack.c.l.b16 %v2964
        %v2998 = vunpack.c.l.b16 %v2965
        %v2999 = vunpack.c.l.b16 %v2966
        %v3000 = vunpack.c.l.b16 %v2967
        %v3001 = vunpack.c.l.b16 %v2968
        %v3002 = vunpack.c.l.b16 %v2969
        %v3003 = vunpack.c.l.b16 %v2970
        %v3004 = vunpack.c.l.b16 %v2971
        %v3005 = vunpack.c.l.b16 %v2972
        %v3006 = vunpack.c.l.b16 %v2973
        %v3007 = vunpack.c.l.b16 %v2974
        %v3008 = vunpack.c.l.b16 %v2975
        %v3009 = vpack.c.b16 %v2994, %v2993
        %v3010 = vpack.c.b16 %v2996, %v2995
        %v3011 = vpack.c.b16 %v2998, %v2997
        %v3012 = vpack.c.b16 %v3000, %v2999
        %v3013 = vpack.c.b16 %v3002, %v3001
        %v3014 = vpack.c.b16 %v3004, %v3003
        %v3015 = vpack.c.b16 %v3006, %v3005
        %v3016 = vpack.c.b16 %v3008, %v3007
        %3025 = vmatprep.subr.bf16.mxu0 0
        %3026 = vmatpush1.bf16.msra.mxu0 %v3009
        %3027 = vmatprep.subr.bf16.mxu0 0
        %3028 = vmatpush1.bf16.msra.mxu0 %v3010
        %3029 = vmatprep.subr.bf16.mxu0 0
        %3030 = vmatpush1.bf16.msra.mxu0 %v3011
        %3031 = vmatprep.subr.bf16.mxu0 0
        %3032 = vmatpush1.bf16.msra.mxu0 %v3012
        %3033 = vmatprep.subr.bf16.mxu0 0
        %3034 = vmatpush1.bf16.msra.mxu0 %v3013
        %3035 = vmatprep.subr.bf16.mxu0 0
        %3036 = vmatpush1.bf16.msra.mxu0 %v3014
        %3037 = vmatprep.subr.bf16.mxu0 0
        %3038 = vmatpush1.bf16.msra.mxu0 %v3015
        %3039 = vmatprep.subr.bf16.mxu0 0
        %3040 = vmatpush1.bf16.msra.mxu0 %v3016
        %3041 = vmatprep.subr.bf16.mxu0 0
        %3042 = vmatpush1.bf16.msra.mxu0 0
        %3043 = vmatprep.subr.bf16.mxu0 0
        %3044 = vmatpush1.bf16.msra.mxu0 0
        %3045 = vmatprep.subr.bf16.mxu0 0
        %3046 = vmatpush1.bf16.msra.mxu0 0
        %3047 = vmatprep.subr.bf16.mxu0 0
        %3048 = vmatpush1.bf16.msra.mxu0 0
        %3049 = vmatprep.subr.bf16.mxu0 0
        %3050 = vmatpush1.bf16.msra.mxu0 0
        %3051 = vmatprep.subr.bf16.mxu0 0
        %3052 = vmatpush1.bf16.msra.mxu0 0
        %3053 = vmatprep.subr.bf16.mxu0 0
        %3054 = vmatpush1.bf16.msra.mxu0 0
        %3055 = vmatprep.subr.bf16.mxu0 0
        %3056 = vmatpush1.bf16.msra.mxu0 0
        %3057 = vmatprep.mubr.bf16.mxu0 0
        %3058 = vmatmul.mubr.bf16.gmra.mrb[0].mxu0 %v2959
        %v3059 = vpop.f32.mrb[0].mxu0
        %v3060 = vadd.f32 %v2976, %v3059
        %v3061 = vpop.f32.mrb[0].mxu0
        %v3062 = vpop.f32.mrb[0].mxu0
        %v3063 = vpop.f32.mrb[0].mxu0
        %3064 = vdwg.mxu0
        %3065 = vst [vmem:[%s433] sm:$0x1] %v3060
        %s3066 = sand.u32 %s313, 1
        %s3067 = scalar_lea.sflag [#allocation6], %s3066
        %s3068 = sand.u32 %s313, 1
        %s3069 = scalar_lea.vmem [#allocation5], %s3068
        // Predicated region
        $region73: #{connet_forward.1} parent=71 // pred_check
          %p3070 = pneg %p323
        $region74: #{connet_forward.1} parent=71 // pred_check_branch
          %3072 = sbr.rel (%p3070) target = $region76
        $region75: #{connet_forward.1} parent=71 // pred_region
          %s3074 = ssub.s32 16, 16
          %3075 = vsyncadd %s3067, %s3074
          %s3076 = smul.addr %s27, 16
          %s3077 = scalar_lea.hbm %s13, %s3076
          %s3079 = sshll.u32 %s3069, 4
          %s3080 = int_to_ptr.vmem [resolvable:$true] %s3079
          %3082 = dma.vmem_to_hbm [thread:$0]  %s3080, 16, %s3077, %s3067
        $region76: #{connet_forward.1} parent=71 // pred_fallthru
          _
      $region72: #{connet_forward.1} parent=5 // pred_fallthru
        _
      %p3083 = scmp.le.s32.totalorder 2, %s22
      // Predicated region
      $region77: #{connet_forward.1} parent=5 // pred_check
        %p3084 = pneg %p3083
      $region78: #{connet_forward.1} parent=5 // pred_check_branch
        %3086 = sbr.rel (%p3084) target = $region80
      $region79: #{connet_forward.1} parent=5 // pred_region
        %s3087 = ssub.s32 %s22, 2
        // Predicated region
        $region81: #{connet_forward.1} parent=79 // pred_check
          %p3088 = pneg %p329
        $region82: #{connet_forward.1} parent=79 // pred_check_branch
          %3090 = sbr.rel (%p3088) target = $region84
        $region83: #{connet_forward.1} parent=79 // pred_region
          %s3091 = sand.u32 %s314, 1
          %s3092 = scalar_lea.sflag [#allocation6], %s3091
          %s3093 = sand.u32 %s314, 1
          %s3094 = scalar_lea.vmem [#allocation5], %s3093
          %3095 = dma.done %s3092, 16
        $region84: #{connet_forward.1} parent=79 // pred_fallthru
          _
      $region80: #{connet_forward.1} parent=5 // pred_fallthru
        _
    $region6: #{connet_forward.1} parent=1 // loop_footer
      %s26 = sadd.s32 1, %s22
    $region7: #{connet_forward.1} parent=1 // loop_footer_branch
      %21 = sbr.rel target = $region3
    $region8: #{connet_forward.1} parent=1 // loop_exit
      _
    %3096 = vsyncpa [#allocation6], 1
    %s3097 = scalar_lea.sflag [#allocation6], 1
    %3098 = vsyncpa %s3097, 1

</llo_original>
